<compile_context>
chip_gen: v5e
topology: v5e:2x2
jax: 0.10.0
libtpu: 0.0.40
codegen_flags: <defaults>
</compile_context>

<pallas_src>
import jax
import jax.numpy as jnp
from jax import lax
from jax.experimental import pallas as pl
from jax.experimental.pallas import tpu as pltpu


def atten_module_pallas(x, w_att, b_att, w1, bn_gamma, bn_beta,
                        bn_mean, bn_var, eps=1e-5):
    """AttenModule forward pass with a Pallas TPU kernel.

    Args:
      x:      (N, Cin, H, W) float32
      w_att:  (1, Cin, 3, 3) float32   attention conv weight
      b_att:  (1,) float32             attention conv bias
      w1:     (Cout, Cin, 3, 3) float32 dilated conv weight (no bias)
      bn_*:   (Cout,) float32          batchnorm params / running stats
    Returns:
      (out, atten): (N, Cout, H, W), (N, 1, H, W)
    """
    N, Cin, H, W = x.shape
    Cout = w1.shape[0]

    # ---- lane-dense flattened-padded layout parameters ----
    WP = ((W + 4 + 7) // 8) * 8                 # padded row width (>= W+4)
    FW = H * WP                                 # full-width flat output len
    LF = (((H + 4) * WP + 4) + 127) // 128 * 128  # flat input len (128-mult.)

    # ---- glue (layout plumbing only): single pad=2 copy, flattened ----
    xp = jnp.pad(x, ((0, 0), (0, 0), (2, 2), (2, WP - W - 2)))
    xf = xp.reshape(N, Cin, (H + 4) * WP)
    xf = jnp.pad(xf, ((0, 0), (0, 0), (0, LF - (H + 4) * WP)))

    # weights as (tap, out_ch, in_ch) VMEM tiles
    w1_taps = jnp.transpose(w1, (2, 3, 0, 1)).reshape(9, Cout, Cin)
    w1_taps = w1_taps.astype(jnp.float32)
    wa_taps = jnp.transpose(w_att, (2, 3, 0, 1)).reshape(9, 1, Cin)
    wa_taps = wa_taps.astype(jnp.float32)

    # fold BatchNorm (inference form) into per-channel scale/shift
    bn_scale = (bn_gamma / jnp.sqrt(bn_var + eps)).astype(jnp.float32)
    bn_shift = (bn_beta - bn_mean * bn_scale).astype(jnp.float32)
    bn_scale = bn_scale.reshape(Cout, 1)
    bn_shift = bn_shift.reshape(Cout, 1)

    def kernel(xf_ref, w1_ref, wa_ref, batt_ref, scale_ref, shift_ref,
               out_ref, atten_ref):
        # xf_ref: (Cin, LF); out_ref: (Cout, FW); atten_ref: (1, FW)
        acc_f = jnp.zeros((Cout, FW), jnp.float32)
        acc_a = jnp.zeros((1, FW), jnp.float32)
        for t in range(9):                       # 3x3 taps, fully unrolled
            ky, kx = divmod(t, 3)
            off_d = 2 * ky * WP + 2 * kx         # dilation=2, pad=2 tap
            off_a = (ky + 1) * WP + (kx + 1)     # dilation=1, pad=1 tap
            xs_d = xf_ref[:, off_d:off_d + FW]   # (Cin, FW)
            xs_a = xf_ref[:, off_a:off_a + FW]   # (Cin, FW)
            acc_f = acc_f + jnp.dot(w1_ref[t], xs_d,
                                    preferred_element_type=jnp.float32)
            acc_a = acc_a + jnp.dot(wa_ref[t], xs_a,
                                    preferred_element_type=jnp.float32)

        atten = jax.nn.sigmoid(acc_a + batt_ref[0])                  # (1, FW)
        feat = jnp.maximum(acc_f * scale_ref[...] + shift_ref[...], 0.0)
        out_ref[...] = (feat * atten).astype(out_ref.dtype)
        atten_ref[...] = atten.astype(atten_ref.dtype)

    out_shape = (
        jax.ShapeDtypeStruct((N, Cout, FW), jnp.float32),
        jax.ShapeDtypeStruct((N, 1, FW), jnp.float32),
    )
    smem_spec = pl.BlockSpec(memory_space=pltpu.MemorySpace.SMEM)

    out_full, atten_full = pl.pallas_call(
        kernel,
        out_shape=out_shape,
        grid_spec=pltpu.PrefetchScalarGridSpec(
            num_scalar_prefetch=0,
            grid=(N,),
            in_specs=[
                pl.BlockSpec((pl.Squeezed(), Cin, LF), lambda n: (n, 0, 0)),
                pl.BlockSpec((9, Cout, Cin), lambda n: (0, 0, 0)),
                pl.BlockSpec((9, 1, Cin), lambda n: (0, 0, 0)),
                smem_spec,                                    # attention bias
                pl.BlockSpec((Cout, 1), lambda n: (0, 0)),    # BN scale
                pl.BlockSpec((Cout, 1), lambda n: (0, 0)),    # BN shift
            ],
            out_specs=[
                pl.BlockSpec((pl.Squeezed(), Cout, FW), lambda n: (n, 0, 0)),
                pl.BlockSpec((pl.Squeezed(), 1, FW), lambda n: (n, 0, 0)),
            ],
        ),
        compiler_params=pltpu.CompilerParams(
            dimension_semantics=("parallel",)),
    )(xf, w1_taps, wa_taps, b_att.astype(jnp.float32), bn_scale, bn_shift)

    # crop the WP - W garbage columns (layout plumbing)
    out = out_full.reshape(N, Cout, H, WP)[:, :, :, :W]
    atten = atten_full.reshape(N, 1, H, WP)[:, :, :, :W]
    return out, atten


def atten_module_ref(x, w_att, b_att, w1, bn_gamma, bn_beta,
                     bn_mean, bn_var, eps=1e-5):
    """Pure-JAX reference (same semantics) for validation."""
    dn = ("NCHW", "OIHW", "NCHW")
    logit = lax.conv_general_dilated(
        x, w_att, window_strides=(1, 1), padding=((1, 1), (1, 1)),
        dimension_numbers=dn) + b_att.reshape(1, 1, 1, 1)
    atten = jax.nn.sigmoid(logit)
    feat = lax.conv_general_dilated(
        x, w1, window_strides=(1, 1), padding=((2, 2), (2, 2)),
        rhs_dilation=(2, 2), dimension_numbers=dn)
    scale = (bn_gamma / jnp.sqrt(bn_var + eps)).reshape(1, -1, 1, 1)
    shift = (bn_beta - bn_mean * bn_gamma / jnp.sqrt(bn_var + eps)
             ).reshape(1, -1, 1, 1)
    feat = jnp.maximum(feat * scale + shift, 0.0)
    return feat * atten, atten


if __name__ == "__main__":
    # Small shapes consistent with the module: N=2, Cin=4, Cout=8, H=W=16.
    N, Cin, Cout, H, W = 2, 4, 8, 16, 16

    key = jax.random.PRNGKey(0)
    kx, ka, kw = jax.random.split(key, 3)

    x = jax.random.normal(kx, (N, Cin, H, W), dtype=jnp.float32)

    # Deterministic init mirroring init_param(): conv weights ~ N(0, 0.01),
    # conv bias = 0, BN gamma = 1, beta = 0 (running stats: mean 0, var 1).
    w_att = 0.01 * jax.random.normal(ka, (1, Cin, 3, 3), dtype=jnp.float32)
    b_att = jnp.zeros((1,), dtype=jnp.float32)
    w1 = 0.01 * jax.random.normal(kw, (Cout, Cin, 3, 3), dtype=jnp.float32)
    bn_gamma = jnp.ones((Cout,), dtype=jnp.float32)
    bn_beta = jnp.zeros((Cout,), dtype=jnp.float32)
    bn_mean = jnp.zeros((Cout,), dtype=jnp.float32)
    bn_var = jnp.ones((Cout,), dtype=jnp.float32)

    out, atten = atten_module_pallas(x, w_att, b_att, w1, bn_gamma, bn_beta,
                                     bn_mean, bn_var)
    jax.block_until_ready((out, atten))

    out_ref, atten_ref = atten_module_ref(x, w_att, b_att, w1, bn_gamma,
                                          bn_beta, bn_mean, bn_var)
    assert out.shape == (N, Cout, H, W) and atten.shape == (N, 1, H, W)
    assert jnp.allclose(out, out_ref, atol=1e-4, rtol=1e-4)
    assert jnp.allclose(atten, atten_ref, atol=1e-4, rtol=1e-4)

    print("KERNEL_OK")
</pallas_src>

<mosaic_0001>
module attributes {stable_mosaic.version = 11 : i64} {
  func.func @kernel(%arg0: i32, %arg1: memref<1x4x512xf32, #tpu.memory_space<vmem>>, %arg2: memref<9x8x4xf32, #tpu.memory_space<vmem>>, %arg3: memref<9x1x4xf32, #tpu.memory_space<vmem>>, %arg4: memref<1xf32, #tpu.memory_space<smem>>, %arg5: memref<8x1xf32, #tpu.memory_space<vmem>>, %arg6: memref<8x1xf32, #tpu.memory_space<vmem>>, %arg7: memref<1x8x384xf32, #tpu.memory_space<vmem>>, %arg8: memref<1x1x384xf32, #tpu.memory_space<vmem>>) attributes {dimension_semantics = [#tpu.dimension_semantics<parallel>], iteration_bounds = array<i64: 2>, scalar_prefetch = 0 : i64, scratch_operands = 0 : i64, tpu.core_type = #tpu.core_type<tc>, window_params = [{transform_indices = @transform_0, window_bounds = array<i64: 1, 4, 512>}, {pipeline_mode = #tpu.pipeline_mode<synchronous>, transform_indices = @transform_1, window_bounds = array<i64: 9, 8, 4>}, {pipeline_mode = #tpu.pipeline_mode<synchronous>, transform_indices = @transform_2, window_bounds = array<i64: 9, 1, 4>}, {transform_indices = @transform_3, window_bounds = array<i64: 1>}, {pipeline_mode = #tpu.pipeline_mode<synchronous>, transform_indices = @transform_4, window_bounds = array<i64: 8, 1>}, {pipeline_mode = #tpu.pipeline_mode<synchronous>, transform_indices = @transform_5, window_bounds = array<i64: 8, 1>}, {transform_indices = @transform_6, window_bounds = array<i64: 1, 8, 384>}, {transform_indices = @transform_7, window_bounds = array<i64: 1, 1, 384>}]} {
    %cst = arith.constant 0.000000e+00 : f32
    %0 = vector.broadcast %cst : f32 to vector<8x384xf32>
    %cst_0 = arith.constant 0.000000e+00 : f32
    %1 = vector.broadcast %cst_0 : f32 to vector<1x384xf32>
    %c0 = arith.constant 0 : index
    %c0_1 = arith.constant 0 : index
    %c0_2 = arith.constant 0 : index
    %2 = vector.load %arg1[%c0, %c0_1, %c0_2] : memref<1x4x512xf32, #tpu.memory_space<vmem>>, vector<1x4x384xf32>
    %3 = vector.shape_cast %2 : vector<1x4x384xf32> to vector<4x384xf32>
    %c0_3 = arith.constant 0 : index
    %c0_4 = arith.constant 0 : index
    %c25 = arith.constant 25 : index
    %4 = vector.load %arg1[%c0_3, %c0_4, %c25] : memref<1x4x512xf32, #tpu.memory_space<vmem>>, vector<1x4x384xf32>
    %5 = vector.shape_cast %4 : vector<1x4x384xf32> to vector<4x384xf32>
    %c0_5 = arith.constant 0 : index
    %c0_6 = arith.constant 0 : index
    %c0_7 = arith.constant 0 : index
    %6 = vector.load %arg2[%c0_5, %c0_6, %c0_7] : memref<9x8x4xf32, #tpu.memory_space<vmem>>, vector<1x8x4xf32>
    %7 = vector.shape_cast %6 : vector<1x8x4xf32> to vector<8x4xf32>
    %cst_8 = arith.constant dense<0.000000e+00> : vector<8x384xf32>
    %8 = tpu.matmul %7, %3, %cst_8 {dimension_numbers = #tpu.dot_dimension_numbers<[1], [0], [0], [1], [0, 0, 1, 1], [], []>} : vector<8x4xf32>, vector<4x384xf32>, vector<8x384xf32> -> vector<8x384xf32>
    %9 = arith.addf %0, %8 : vector<8x384xf32>
    %c0_9 = arith.constant 0 : index
    %c0_10 = arith.constant 0 : index
    %c0_11 = arith.constant 0 : index
    %10 = vector.load %arg3[%c0_9, %c0_10, %c0_11] : memref<9x1x4xf32, #tpu.memory_space<vmem>>, vector<1x1x4xf32>
    %11 = vector.shape_cast %10 : vector<1x1x4xf32> to vector<1x4xf32>
    %cst_12 = arith.constant dense<0.000000e+00> : vector<1x384xf32>
    %12 = tpu.matmul %11, %5, %cst_12 {dimension_numbers = #tpu.dot_dimension_numbers<[1], [0], [0], [1], [0, 0, 1, 1], [], []>} : vector<1x4xf32>, vector<4x384xf32>, vector<1x384xf32> -> vector<1x384xf32>
    %13 = arith.addf %1, %12 : vector<1x384xf32>
    %c0_13 = arith.constant 0 : index
    %c0_14 = arith.constant 0 : index
    %c2 = arith.constant 2 : index
    %14 = vector.load %arg1[%c0_13, %c0_14, %c2] : memref<1x4x512xf32, #tpu.memory_space<vmem>>, vector<1x4x384xf32>
    %15 = vector.shape_cast %14 : vector<1x4x384xf32> to vector<4x384xf32>
    %c0_15 = arith.constant 0 : index
    %c0_16 = arith.constant 0 : index
    %c26 = arith.constant 26 : index
    %16 = vector.load %arg1[%c0_15, %c0_16, %c26] : memref<1x4x512xf32, #tpu.memory_space<vmem>>, vector<1x4x384xf32>
    %17 = vector.shape_cast %16 : vector<1x4x384xf32> to vector<4x384xf32>
    %c1 = arith.constant 1 : index
    %c0_17 = arith.constant 0 : index
    %c0_18 = arith.constant 0 : index
    %18 = vector.load %arg2[%c1, %c0_17, %c0_18] : memref<9x8x4xf32, #tpu.memory_space<vmem>>, vector<1x8x4xf32>
    %19 = vector.shape_cast %18 : vector<1x8x4xf32> to vector<8x4xf32>
    %cst_19 = arith.constant dense<0.000000e+00> : vector<8x384xf32>
    %20 = tpu.matmul %19, %15, %cst_19 {dimension_numbers = #tpu.dot_dimension_numbers<[1], [0], [0], [1], [0, 0, 1, 1], [], []>} : vector<8x4xf32>, vector<4x384xf32>, vector<8x384xf32> -> vector<8x384xf32>
    %21 = arith.addf %9, %20 : vector<8x384xf32>
    %c1_20 = arith.constant 1 : index
    %c0_21 = arith.constant 0 : index
    %c0_22 = arith.constant 0 : index
    %22 = vector.load %arg3[%c1_20, %c0_21, %c0_22] : memref<9x1x4xf32, #tpu.memory_space<vmem>>, vector<1x1x4xf32>
    %23 = vector.shape_cast %22 : vector<1x1x4xf32> to vector<1x4xf32>
    %cst_23 = arith.constant dense<0.000000e+00> : vector<1x384xf32>
    %24 = tpu.matmul %23, %17, %cst_23 {dimension_numbers = #tpu.dot_dimension_numbers<[1], [0], [0], [1], [0, 0, 1, 1], [], []>} : vector<1x4xf32>, vector<4x384xf32>, vector<1x384xf32> -> vector<1x384xf32>
    %25 = arith.addf %13, %24 : vector<1x384xf32>
    %c0_24 = arith.constant 0 : index
    %c0_25 = arith.constant 0 : index
    %c4 = arith.constant 4 : index
    %26 = vector.load %arg1[%c0_24, %c0_25, %c4] : memref<1x4x512xf32, #tpu.memory_space<vmem>>, vector<1x4x384xf32>
    %27 = vector.shape_cast %26 : vector<1x4x384xf32> to vector<4x384xf32>
    %c0_26 = arith.constant 0 : index
    %c0_27 = arith.constant 0 : index
    %c27 = arith.constant 27 : index
    %28 = vector.load %arg1[%c0_26, %c0_27, %c27] : memref<1x4x512xf32, #tpu.memory_space<vmem>>, vector<1x4x384xf32>
    %29 = vector.shape_cast %28 : vector<1x4x384xf32> to vector<4x384xf32>
    %c2_28 = arith.constant 2 : index
    %c0_29 = arith.constant 0 : index
    %c0_30 = arith.constant 0 : index
    %30 = vector.load %arg2[%c2_28, %c0_29, %c0_30] : memref<9x8x4xf32, #tpu.memory_space<vmem>>, vector<1x8x4xf32>
    %31 = vector.shape_cast %30 : vector<1x8x4xf32> to vector<8x4xf32>
    %cst_31 = arith.constant dense<0.000000e+00> : vector<8x384xf32>
    %32 = tpu.matmul %31, %27, %cst_31 {dimension_numbers = #tpu.dot_dimension_numbers<[1], [0], [0], [1], [0, 0, 1, 1], [], []>} : vector<8x4xf32>, vector<4x384xf32>, vector<8x384xf32> -> vector<8x384xf32>
    %33 = arith.addf %21, %32 : vector<8x384xf32>
    %c2_32 = arith.constant 2 : index
    %c0_33 = arith.constant 0 : index
    %c0_34 = arith.constant 0 : index
    %34 = vector.load %arg3[%c2_32, %c0_33, %c0_34] : memref<9x1x4xf32, #tpu.memory_space<vmem>>, vector<1x1x4xf32>
    %35 = vector.shape_cast %34 : vector<1x1x4xf32> to vector<1x4xf32>
    %cst_35 = arith.constant dense<0.000000e+00> : vector<1x384xf32>
    %36 = tpu.matmul %35, %29, %cst_35 {dimension_numbers = #tpu.dot_dimension_numbers<[1], [0], [0], [1], [0, 0, 1, 1], [], []>} : vector<1x4xf32>, vector<4x384xf32>, vector<1x384xf32> -> vector<1x384xf32>
    %37 = arith.addf %25, %36 : vector<1x384xf32>
    %c0_36 = arith.constant 0 : index
    %c0_37 = arith.constant 0 : index
    %c48 = arith.constant 48 : index
    %38 = vector.load %arg1[%c0_36, %c0_37, %c48] : memref<1x4x512xf32, #tpu.memory_space<vmem>>, vector<1x4x384xf32>
    %39 = vector.shape_cast %38 : vector<1x4x384xf32> to vector<4x384xf32>
    %c0_38 = arith.constant 0 : index
    %c0_39 = arith.constant 0 : index
    %c49 = arith.constant 49 : index
    %40 = vector.load %arg1[%c0_38, %c0_39, %c49] : memref<1x4x512xf32, #tpu.memory_space<vmem>>, vector<1x4x384xf32>
    %41 = vector.shape_cast %40 : vector<1x4x384xf32> to vector<4x384xf32>
    %c3 = arith.constant 3 : index
    %c0_40 = arith.constant 0 : index
    %c0_41 = arith.constant 0 : index
    %42 = vector.load %arg2[%c3, %c0_40, %c0_41] : memref<9x8x4xf32, #tpu.memory_space<vmem>>, vector<1x8x4xf32>
    %43 = vector.shape_cast %42 : vector<1x8x4xf32> to vector<8x4xf32>
    %cst_42 = arith.constant dense<0.000000e+00> : vector<8x384xf32>
    %44 = tpu.matmul %43, %39, %cst_42 {dimension_numbers = #tpu.dot_dimension_numbers<[1], [0], [0], [1], [0, 0, 1, 1], [], []>} : vector<8x4xf32>, vector<4x384xf32>, vector<8x384xf32> -> vector<8x384xf32>
    %45 = arith.addf %33, %44 : vector<8x384xf32>
    %c3_43 = arith.constant 3 : index
    %c0_44 = arith.constant 0 : index
    %c0_45 = arith.constant 0 : index
    %46 = vector.load %arg3[%c3_43, %c0_44, %c0_45] : memref<9x1x4xf32, #tpu.memory_space<vmem>>, vector<1x1x4xf32>
    %47 = vector.shape_cast %46 : vector<1x1x4xf32> to vector<1x4xf32>
    %cst_46 = arith.constant dense<0.000000e+00> : vector<1x384xf32>
    %48 = tpu.matmul %47, %41, %cst_46 {dimension_numbers = #tpu.dot_dimension_numbers<[1], [0], [0], [1], [0, 0, 1, 1], [], []>} : vector<1x4xf32>, vector<4x384xf32>, vector<1x384xf32> -> vector<1x384xf32>
    %49 = arith.addf %37, %48 : vector<1x384xf32>
    %c0_47 = arith.constant 0 : index
    %c0_48 = arith.constant 0 : index
    %c50 = arith.constant 50 : index
    %50 = vector.load %arg1[%c0_47, %c0_48, %c50] : memref<1x4x512xf32, #tpu.memory_space<vmem>>, vector<1x4x384xf32>
    %51 = vector.shape_cast %50 : vector<1x4x384xf32> to vector<4x384xf32>
    %c0_49 = arith.constant 0 : index
    %c0_50 = arith.constant 0 : index
    %c50_51 = arith.constant 50 : index
    %52 = vector.load %arg1[%c0_49, %c0_50, %c50_51] : memref<1x4x512xf32, #tpu.memory_space<vmem>>, vector<1x4x384xf32>
    %53 = vector.shape_cast %52 : vector<1x4x384xf32> to vector<4x384xf32>
    %c4_52 = arith.constant 4 : index
    %c0_53 = arith.constant 0 : index
    %c0_54 = arith.constant 0 : index
    %54 = vector.load %arg2[%c4_52, %c0_53, %c0_54] : memref<9x8x4xf32, #tpu.memory_space<vmem>>, vector<1x8x4xf32>
    %55 = vector.shape_cast %54 : vector<1x8x4xf32> to vector<8x4xf32>
    %cst_55 = arith.constant dense<0.000000e+00> : vector<8x384xf32>
    %56 = tpu.matmul %55, %51, %cst_55 {dimension_numbers = #tpu.dot_dimension_numbers<[1], [0], [0], [1], [0, 0, 1, 1], [], []>} : vector<8x4xf32>, vector<4x384xf32>, vector<8x384xf32> -> vector<8x384xf32>
    %57 = arith.addf %45, %56 : vector<8x384xf32>
    %c4_56 = arith.constant 4 : index
    %c0_57 = arith.constant 0 : index
    %c0_58 = arith.constant 0 : index
    %58 = vector.load %arg3[%c4_56, %c0_57, %c0_58] : memref<9x1x4xf32, #tpu.memory_space<vmem>>, vector<1x1x4xf32>
    %59 = vector.shape_cast %58 : vector<1x1x4xf32> to vector<1x4xf32>
    %cst_59 = arith.constant dense<0.000000e+00> : vector<1x384xf32>
    %60 = tpu.matmul %59, %53, %cst_59 {dimension_numbers = #tpu.dot_dimension_numbers<[1], [0], [0], [1], [0, 0, 1, 1], [], []>} : vector<1x4xf32>, vector<4x384xf32>, vector<1x384xf32> -> vector<1x384xf32>
    %61 = arith.addf %49, %60 : vector<1x384xf32>
    %c0_60 = arith.constant 0 : index
    %c0_61 = arith.constant 0 : index
    %c52 = arith.constant 52 : index
    %62 = vector.load %arg1[%c0_60, %c0_61, %c52] : memref<1x4x512xf32, #tpu.memory_space<vmem>>, vector<1x4x384xf32>
    %63 = vector.shape_cast %62 : vector<1x4x384xf32> to vector<4x384xf32>
    %c0_62 = arith.constant 0 : index
    %c0_63 = arith.constant 0 : index
    %c51 = arith.constant 51 : index
    %64 = vector.load %arg1[%c0_62, %c0_63, %c51] : memref<1x4x512xf32, #tpu.memory_space<vmem>>, vector<1x4x384xf32>
    %65 = vector.shape_cast %64 : vector<1x4x384xf32> to vector<4x384xf32>
    %c5 = arith.constant 5 : index
    %c0_64 = arith.constant 0 : index
    %c0_65 = arith.constant 0 : index
    %66 = vector.load %arg2[%c5, %c0_64, %c0_65] : memref<9x8x4xf32, #tpu.memory_space<vmem>>, vector<1x8x4xf32>
    %67 = vector.shape_cast %66 : vector<1x8x4xf32> to vector<8x4xf32>
    %cst_66 = arith.constant dense<0.000000e+00> : vector<8x384xf32>
    %68 = tpu.matmul %67, %63, %cst_66 {dimension_numbers = #tpu.dot_dimension_numbers<[1], [0], [0], [1], [0, 0, 1, 1], [], []>} : vector<8x4xf32>, vector<4x384xf32>, vector<8x384xf32> -> vector<8x384xf32>
    %69 = arith.addf %57, %68 : vector<8x384xf32>
    %c5_67 = arith.constant 5 : index
    %c0_68 = arith.constant 0 : index
    %c0_69 = arith.constant 0 : index
    %70 = vector.load %arg3[%c5_67, %c0_68, %c0_69] : memref<9x1x4xf32, #tpu.memory_space<vmem>>, vector<1x1x4xf32>
    %71 = vector.shape_cast %70 : vector<1x1x4xf32> to vector<1x4xf32>
    %cst_70 = arith.constant dense<0.000000e+00> : vector<1x384xf32>
    %72 = tpu.matmul %71, %65, %cst_70 {dimension_numbers = #tpu.dot_dimension_numbers<[1], [0], [0], [1], [0, 0, 1, 1], [], []>} : vector<1x4xf32>, vector<4x384xf32>, vector<1x384xf32> -> vector<1x384xf32>
    %73 = arith.addf %61, %72 : vector<1x384xf32>
    %c0_71 = arith.constant 0 : index
    %c0_72 = arith.constant 0 : index
    %c96 = arith.constant 96 : index
    %74 = vector.load %arg1[%c0_71, %c0_72, %c96] : memref<1x4x512xf32, #tpu.memory_space<vmem>>, vector<1x4x384xf32>
    %75 = vector.shape_cast %74 : vector<1x4x384xf32> to vector<4x384xf32>
    %c0_73 = arith.constant 0 : index
    %c0_74 = arith.constant 0 : index
    %c73 = arith.constant 73 : index
    %76 = vector.load %arg1[%c0_73, %c0_74, %c73] : memref<1x4x512xf32, #tpu.memory_space<vmem>>, vector<1x4x384xf32>
    %77 = vector.shape_cast %76 : vector<1x4x384xf32> to vector<4x384xf32>
    %c6 = arith.constant 6 : index
    %c0_75 = arith.constant 0 : index
    %c0_76 = arith.constant 0 : index
    %78 = vector.load %arg2[%c6, %c0_75, %c0_76] : memref<9x8x4xf32, #tpu.memory_space<vmem>>, vector<1x8x4xf32>
    %79 = vector.shape_cast %78 : vector<1x8x4xf32> to vector<8x4xf32>
    %cst_77 = arith.constant dense<0.000000e+00> : vector<8x384xf32>
    %80 = tpu.matmul %79, %75, %cst_77 {dimension_numbers = #tpu.dot_dimension_numbers<[1], [0], [0], [1], [0, 0, 1, 1], [], []>} : vector<8x4xf32>, vector<4x384xf32>, vector<8x384xf32> -> vector<8x384xf32>
    %81 = arith.addf %69, %80 : vector<8x384xf32>
    %c6_78 = arith.constant 6 : index
    %c0_79 = arith.constant 0 : index
    %c0_80 = arith.constant 0 : index
    %82 = vector.load %arg3[%c6_78, %c0_79, %c0_80] : memref<9x1x4xf32, #tpu.memory_space<vmem>>, vector<1x1x4xf32>
    %83 = vector.shape_cast %82 : vector<1x1x4xf32> to vector<1x4xf32>
    %cst_81 = arith.constant dense<0.000000e+00> : vector<1x384xf32>
    %84 = tpu.matmul %83, %77, %cst_81 {dimension_numbers = #tpu.dot_dimension_numbers<[1], [0], [0], [1], [0, 0, 1, 1], [], []>} : vector<1x4xf32>, vector<4x384xf32>, vector<1x384xf32> -> vector<1x384xf32>
    %85 = arith.addf %73, %84 : vector<1x384xf32>
    %c0_82 = arith.constant 0 : index
    %c0_83 = arith.constant 0 : index
    %c98 = arith.constant 98 : index
    %86 = vector.load %arg1[%c0_82, %c0_83, %c98] : memref<1x4x512xf32, #tpu.memory_space<vmem>>, vector<1x4x384xf32>
    %87 = vector.shape_cast %86 : vector<1x4x384xf32> to vector<4x384xf32>
    %c0_84 = arith.constant 0 : index
    %c0_85 = arith.constant 0 : index
    %c74 = arith.constant 74 : index
    %88 = vector.load %arg1[%c0_84, %c0_85, %c74] : memref<1x4x512xf32, #tpu.memory_space<vmem>>, vector<1x4x384xf32>
    %89 = vector.shape_cast %88 : vector<1x4x384xf32> to vector<4x384xf32>
    %c7 = arith.constant 7 : index
    %c0_86 = arith.constant 0 : index
    %c0_87 = arith.constant 0 : index
    %90 = vector.load %arg2[%c7, %c0_86, %c0_87] : memref<9x8x4xf32, #tpu.memory_space<vmem>>, vector<1x8x4xf32>
    %91 = vector.shape_cast %90 : vector<1x8x4xf32> to vector<8x4xf32>
    %cst_88 = arith.constant dense<0.000000e+00> : vector<8x384xf32>
    %92 = tpu.matmul %91, %87, %cst_88 {dimension_numbers = #tpu.dot_dimension_numbers<[1], [0], [0], [1], [0, 0, 1, 1], [], []>} : vector<8x4xf32>, vector<4x384xf32>, vector<8x384xf32> -> vector<8x384xf32>
    %93 = arith.addf %81, %92 : vector<8x384xf32>
    %c7_89 = arith.constant 7 : index
    %c0_90 = arith.constant 0 : index
    %c0_91 = arith.constant 0 : index
    %94 = vector.load %arg3[%c7_89, %c0_90, %c0_91] : memref<9x1x4xf32, #tpu.memory_space<vmem>>, vector<1x1x4xf32>
    %95 = vector.shape_cast %94 : vector<1x1x4xf32> to vector<1x4xf32>
    %cst_92 = arith.constant dense<0.000000e+00> : vector<1x384xf32>
    %96 = tpu.matmul %95, %89, %cst_92 {dimension_numbers = #tpu.dot_dimension_numbers<[1], [0], [0], [1], [0, 0, 1, 1], [], []>} : vector<1x4xf32>, vector<4x384xf32>, vector<1x384xf32> -> vector<1x384xf32>
    %97 = arith.addf %85, %96 : vector<1x384xf32>
    %c0_93 = arith.constant 0 : index
    %c0_94 = arith.constant 0 : index
    %c100 = arith.constant 100 : index
    %98 = vector.load %arg1[%c0_93, %c0_94, %c100] : memref<1x4x512xf32, #tpu.memory_space<vmem>>, vector<1x4x384xf32>
    %99 = vector.shape_cast %98 : vector<1x4x384xf32> to vector<4x384xf32>
    %c0_95 = arith.constant 0 : index
    %c0_96 = arith.constant 0 : index
    %c75 = arith.constant 75 : index
    %100 = vector.load %arg1[%c0_95, %c0_96, %c75] : memref<1x4x512xf32, #tpu.memory_space<vmem>>, vector<1x4x384xf32>
    %101 = vector.shape_cast %100 : vector<1x4x384xf32> to vector<4x384xf32>
    %c8 = arith.constant 8 : index
    %c0_97 = arith.constant 0 : index
    %c0_98 = arith.constant 0 : index
    %102 = vector.load %arg2[%c8, %c0_97, %c0_98] : memref<9x8x4xf32, #tpu.memory_space<vmem>>, vector<1x8x4xf32>
    %103 = vector.shape_cast %102 : vector<1x8x4xf32> to vector<8x4xf32>
    %cst_99 = arith.constant dense<0.000000e+00> : vector<8x384xf32>
    %104 = tpu.matmul %103, %99, %cst_99 {dimension_numbers = #tpu.dot_dimension_numbers<[1], [0], [0], [1], [0, 0, 1, 1], [], []>} : vector<8x4xf32>, vector<4x384xf32>, vector<8x384xf32> -> vector<8x384xf32>
    %105 = arith.addf %93, %104 : vector<8x384xf32>
    %c8_100 = arith.constant 8 : index
    %c0_101 = arith.constant 0 : index
    %c0_102 = arith.constant 0 : index
    %106 = vector.load %arg3[%c8_100, %c0_101, %c0_102] : memref<9x1x4xf32, #tpu.memory_space<vmem>>, vector<1x1x4xf32>
    %107 = vector.shape_cast %106 : vector<1x1x4xf32> to vector<1x4xf32>
    %cst_103 = arith.constant dense<0.000000e+00> : vector<1x384xf32>
    %108 = tpu.matmul %107, %101, %cst_103 {dimension_numbers = #tpu.dot_dimension_numbers<[1], [0], [0], [1], [0, 0, 1, 1], [], []>} : vector<1x4xf32>, vector<4x384xf32>, vector<1x384xf32> -> vector<1x384xf32>
    %109 = arith.addf %97, %108 : vector<1x384xf32>
    %c0_104 = arith.constant 0 : index
    %110 = memref.load %arg4[%c0_104] : memref<1xf32, #tpu.memory_space<smem>>
    %111 = vector.broadcast %110 : f32 to vector<1x384xf32>
    %112 = arith.addf %109, %111 : vector<1x384xf32>
    %113 = arith.negf %112 : vector<1x384xf32>
    %114 = math.exp %113 : vector<1x384xf32>
    %cst_105 = arith.constant 1.000000e+00 : f32
    %115 = vector.broadcast %cst_105 : f32 to vector<1x384xf32>
    %116 = arith.addf %115, %114 : vector<1x384xf32>
    %117 = arith.divf %115, %116 : vector<1x384xf32>
    %c0_106 = arith.constant 0 : index
    %c0_107 = arith.constant 0 : index
    %118 = vector.load %arg5[%c0_106, %c0_107] : memref<8x1xf32, #tpu.memory_space<vmem>>, vector<8x1xf32>
    %119 = vector.broadcast %118 : vector<8x1xf32> to vector<8x384xf32>
    %120 = arith.mulf %105, %119 : vector<8x384xf32>
    %c0_108 = arith.constant 0 : index
    %c0_109 = arith.constant 0 : index
    %121 = vector.load %arg6[%c0_108, %c0_109] : memref<8x1xf32, #tpu.memory_space<vmem>>, vector<8x1xf32>
    %122 = vector.broadcast %121 : vector<8x1xf32> to vector<8x384xf32>
    %123 = arith.addf %120, %122 : vector<8x384xf32>
    %cst_110 = arith.constant 0.000000e+00 : f32
    %124 = vector.broadcast %cst_110 : f32 to vector<8x384xf32>
    %125 = arith.maximumf %123, %124 : vector<8x384xf32>
    %126 = vector.broadcast %117 : vector<1x384xf32> to vector<8x384xf32>
    %127 = arith.mulf %125, %126 : vector<8x384xf32>
    %c0_111 = arith.constant 0 : index
    %c0_112 = arith.constant 0 : index
    %c0_113 = arith.constant 0 : index
    %128 = vector.load %arg7[%c0_111, %c0_112, %c0_113] : memref<1x8x384xf32, #tpu.memory_space<vmem>>, vector<1x8x384xf32>
    %129 = vector.shape_cast %128 : vector<1x8x384xf32> to vector<8x384xf32>
    %130 = vector.shape_cast %127 : vector<8x384xf32> to vector<1x8x384xf32>
    tpu.vector_store %arg7[%c0_111, %c0_112, %c0_113], %130 {strides = array<i32>} : memref<1x8x384xf32, #tpu.memory_space<vmem>>, vector<1x8x384xf32>,
    %c0_114 = arith.constant 0 : index
    %c0_115 = arith.constant 0 : index
    %c0_116 = arith.constant 0 : index
    %131 = vector.load %arg8[%c0_114, %c0_115, %c0_116] : memref<1x1x384xf32, #tpu.memory_space<vmem>>, vector<1x1x384xf32>
    %132 = vector.shape_cast %131 : vector<1x1x384xf32> to vector<1x384xf32>
    %133 = vector.shape_cast %117 : vector<1x384xf32> to vector<1x1x384xf32>
    tpu.vector_store %arg8[%c0_114, %c0_115, %c0_116], %133 {strides = array<i32>} : memref<1x1x384xf32, #tpu.memory_space<vmem>>, vector<1x1x384xf32>,
    return
  }
  func.func @transform_0(%arg0: i32) -> (i32, i32, i32) {
    %c0_i32 = arith.constant 0 : i32
    %c0_i32_0 = arith.constant 0 : i32
    %c0_i32_1 = arith.constant 0 : i32
    return %arg0, %c0_i32, %c0_i32_0 : i32, i32, i32
  }
  func.func @transform_1(%arg0: i32) -> (i32, i32, i32) {
    %c0_i32 = arith.constant 0 : i32
    %c0_i32_0 = arith.constant 0 : i32
    %c0_i32_1 = arith.constant 0 : i32
    %c0_i32_2 = arith.constant 0 : i32
    return %c0_i32, %c0_i32_0, %c0_i32_1 : i32, i32, i32
  }
  func.func @transform_2(%arg0: i32) -> (i32, i32, i32) {
    %c0_i32 = arith.constant 0 : i32
    %c0_i32_0 = arith.constant 0 : i32
    %c0_i32_1 = arith.constant 0 : i32
    %c0_i32_2 = arith.constant 0 : i32
    return %c0_i32, %c0_i32_0, %c0_i32_1 : i32, i32, i32
  }
  func.func @transform_3(%arg0: i32) -> i32 {
    %c0_i32 = arith.constant 0 : i32
    %c0_i32_0 = arith.constant 0 : i32
    return %c0_i32 : i32
  }
  func.func @transform_4(%arg0: i32) -> (i32, i32) {
    %c0_i32 = arith.constant 0 : i32
    %c0_i32_0 = arith.constant 0 : i32
    %c0_i32_1 = arith.constant 0 : i32
    return %c0_i32, %c0_i32_0 : i32, i32
  }
  func.func @transform_5(%arg0: i32) -> (i32, i32) {
    %c0_i32 = arith.constant 0 : i32
    %c0_i32_0 = arith.constant 0 : i32
    %c0_i32_1 = arith.constant 0 : i32
    return %c0_i32, %c0_i32_0 : i32, i32
  }
  func.func @transform_6(%arg0: i32) -> (i32, i32, i32) {
    %c0_i32 = arith.constant 0 : i32
    %c0_i32_0 = arith.constant 0 : i32
    %c0_i32_1 = arith.constant 0 : i32
    return %arg0, %c0_i32, %c0_i32_0 : i32, i32, i32
  }
  func.func @transform_7(%arg0: i32) -> (i32, i32, i32) {
    %c0_i32 = arith.constant 0 : i32
    %c0_i32_0 = arith.constant 0 : i32
    %c0_i32_1 = arith.constant 0 : i32
    return %arg0, %c0_i32, %c0_i32_0 : i32, i32, i32
  }
}

</mosaic_0001>

<llo_original>
// kernel: tpu_custom_call.1
$region0: #{tpu_custom_call.1}
  #allocation0 [shape = 'u32[]', space=smem, size = 0x4, offset = 0x4, fixed_abs, tag = 'smem constant byte address 0x4 - core index']
  #allocation1 [shape = 'u32[72,128]{1,0:T(1,128)}', space=vmem, size = 0x9000, scoped, tag = 'internal scratch']
  #allocation2 [shape = 'f32[1]{0:T(128)S(6)}', space=smem, size = 0x200, scoped, tag = 'scoped memory for tpu_custom_call.1']
  %s0 = inlined_call_operand.vmem [shape: f32[2,4,512], index: 0, kind: input, shape index: {}]
  %s1 = inlined_call_operand.vmem [shape: f32[9,8,4], index: 1, kind: input, shape index: {}]
  %s2 = inlined_call_operand.vmem [shape: f32[9,1,4], index: 2, kind: input, shape index: {}]
  %s3 = inlined_call_operand.<no memory space> [shape: f32[1], index: 3, kind: input, shape index: {}]
  %s4 = inlined_call_operand.vmem [shape: f32[8,1], index: 4, kind: input, shape index: {}]
  %s5 = inlined_call_operand.vmem [shape: f32[8,1], index: 5, kind: input, shape index: {}]
  %s6 = inlined_call_operand.hbm [shape: f32[2,8,384], index: 6, kind: output, shape index: {0}]
  %s7 = inlined_call_operand.hbm [shape: f32[2,1,384], index: 7, kind: output, shape index: {1}]
  %8 = xla_tuple %s6, %s7
  %s9 = sld [smem:[#allocation0]]
  $region65: #{tpu_custom_call.1} parent=0
    _
  %s11 = ssub.s32 1, %s9
  %s12 = scalar_select 0, %s11, %s9
  %13 = sst [smem:[#allocation2]] %s3
  $region1: #{tpu_custom_call.1} parent=0
    #allocation3 [shape = 'u8[24576]{0}', space=vmem, size = 0x6000, scoped, tag = 'output window, operand 0']
    #allocation4 [shape = 's32[2]{0}', space=sflag, size = 0x8, scoped, tag = 'scoped memory for tpu_custom_call.1']
    #allocation5 [shape = 'u8[3072]{0}', space=vmem, size = 0xc00, scoped, tag = 'output window, operand 1']
    #allocation6 [shape = 's32[2]{0}', space=sflag, size = 0x8, scoped, tag = 'scoped memory for tpu_custom_call.1']
    %14 = vsyncpa [#allocation4], 0
    %s15 = scalar_lea.sflag [#allocation4], 1
    %16 = vsyncpa %s15, 0
    %17 = vsyncpa [#allocation6], 0
    %s18 = scalar_lea.sflag [#allocation6], 1
    %19 = vsyncpa %s18, 0
    loop: start=0, step=1, limit=4
    $region2: #{tpu_custom_call.1} parent=1 // loop_pre_header
      _
    $region3: #{tpu_custom_call.1} parent=1 // loop_header
      %s21 = sphi 0, %s25
      %p22 = scmp.ge.s32.totalorder %s21, 4
      %s31 = sphi 0, %s33
      %s34 = sphi 0, %s31
      %s35 = sphi 0, %s34
      %s51 = sphi 0, %s35
      %s55 = sphi 0, %s55
      %s57 = sphi 0, %s55
      %s58 = sphi 0, %s57
      %s72 = sphi 0, %s58
      %s76 = sphi 0, %s76
      %s78 = sphi 0, %s76
      %s79 = sphi 0, %s78
      %s93 = sphi 0, %s79
      %s97 = sphi 0, %s97
      %s99 = sphi 0, %s97
      %s100 = sphi 0, %s99
      %s114 = sphi 0, %s100
      %s118 = sphi 0, %s118
      %s120 = sphi 0, %s118
      %s121 = sphi 0, %s120
      %s135 = sphi 0, %s121
      %s139 = sphi 0, %s139
      %s141 = sphi 0, %s139
      %s142 = sphi 0, %s141
      %s156 = sphi 0, %s142
      %s162 = sphi 0, %s164
      %s165 = sphi 0, %s162
      %s166 = sphi 0, %s165
      %s182 = sphi 0, %s166
      %s188 = sphi 0, %s190
      %s191 = sphi 0, %s188
      %s192 = sphi 0, %s191
      %s208 = sphi 0, %s192
    $region4: #{tpu_custom_call.1} parent=1 // loop_header_branch
      %24 = sbr.rel (%p22) target = $region8
    $region5: #{tpu_custom_call.1} parent=1 // loop_body
      %s26 = ssub.s32 %s21, 1
      %s27 = ssub.s32 %s21, 2
      %s28 = sadd.s32 %s21, 1
      %s29 = ssub.s32 %s21, %s28
      %p30 = scmp.eq.s32.totalorder %s29, 0
      %s32 = sadd.s32 %s31, 1
      %s33 = scalar_select %p30, %s31, %s32
      %p36 = pneg %p30
      %p37 = scmp.eq.s32.totalorder %s21, 1
      %p38 = por %p36, %p37
      %p39 = scmp.ne.s32.totalorder %s31, %s34
      %p40 = scmp.eq.s32.totalorder %s21, 0
      %p41 = por %p39, %p40
      %p42 = scmp.ne.s32.totalorder %s31, %s34
      %p43 = scmp.eq.s32.totalorder %s26, 1
      %p44 = por %p42, %p43
      %p45 = scmp.ne.s32.totalorder %s34, %s35
      %p46 = scmp.eq.s32.totalorder %s26, 0
      %p47 = por %p45, %p46
      %p48 = scmp.ne.s32.totalorder %s34, %s35
      %p49 = scmp.eq.s32.totalorder %s27, 1
      %p50 = por %p48, %p49
      %p52 = scmp.ne.s32.totalorder %s35, %s51
      %p53 = scmp.eq.s32.totalorder %s27, 0
      %p54 = por %p52, %p53
      %s56 = sadd.s32 %s55, 1
      %p59 = scmp.eq.s32.totalorder %s21, 1
      %p60 = scmp.ne.s32.totalorder %s55, %s57
      %p61 = scmp.eq.s32.totalorder %s21, 0
      %p62 = por %p60, %p61
      %p63 = scmp.ne.s32.totalorder %s55, %s57
      %p64 = scmp.eq.s32.totalorder %s26, 1
      %p65 = por %p63, %p64
      %p66 = scmp.ne.s32.totalorder %s57, %s58
      %p67 = scmp.eq.s32.totalorder %s26, 0
      %p68 = por %p66, %p67
      %p69 = scmp.ne.s32.totalorder %s57, %s58
      %p70 = scmp.eq.s32.totalorder %s27, 1
      %p71 = por %p69, %p70
      %p73 = scmp.ne.s32.totalorder %s58, %s72
      %p74 = scmp.eq.s32.totalorder %s27, 0
      %p75 = por %p73, %p74
      %s77 = sadd.s32 %s76, 1
      %p80 = scmp.eq.s32.totalorder %s21, 1
      %p81 = scmp.ne.s32.totalorder %s76, %s78
      %p82 = scmp.eq.s32.totalorder %s21, 0
      %p83 = por %p81, %p82
      %p84 = scmp.ne.s32.totalorder %s76, %s78
      %p85 = scmp.eq.s32.totalorder %s26, 1
      %p86 = por %p84, %p85
      %p87 = scmp.ne.s32.totalorder %s78, %s79
      %p88 = scmp.eq.s32.totalorder %s26, 0
      %p89 = por %p87, %p88
      %p90 = scmp.ne.s32.totalorder %s78, %s79
      %p91 = scmp.eq.s32.totalorder %s27, 1
      %p92 = por %p90, %p91
      %p94 = scmp.ne.s32.totalorder %s79, %s93
      %p95 = scmp.eq.s32.totalorder %s27, 0
      %p96 = por %p94, %p95
      %s98 = sadd.s32 %s97, 1
      %p101 = scmp.eq.s32.totalorder %s21, 1
      %p102 = scmp.ne.s32.totalorder %s97, %s99
      %p103 = scmp.eq.s32.totalorder %s21, 0
      %p104 = por %p102, %p103
      %p105 = scmp.ne.s32.totalorder %s97, %s99
      %p106 = scmp.eq.s32.totalorder %s26, 1
      %p107 = por %p105, %p106
      %p108 = scmp.ne.s32.totalorder %s99, %s100
      %p109 = scmp.eq.s32.totalorder %s26, 0
      %p110 = por %p108, %p109
      %p111 = scmp.ne.s32.totalorder %s99, %s100
      %p112 = scmp.eq.s32.totalorder %s27, 1
      %p113 = por %p111, %p112
      %p115 = scmp.ne.s32.totalorder %s100, %s114
      %p116 = scmp.eq.s32.totalorder %s27, 0
      %p117 = por %p115, %p116
      %s119 = sadd.s32 %s118, 1
      %p122 = scmp.eq.s32.totalorder %s21, 1
      %p123 = scmp.ne.s32.totalorder %s118, %s120
      %p124 = scmp.eq.s32.totalorder %s21, 0
      %p125 = por %p123, %p124
      %p126 = scmp.ne.s32.totalorder %s118, %s120
      %p127 = scmp.eq.s32.totalorder %s26, 1
      %p128 = por %p126, %p127
      %p129 = scmp.ne.s32.totalorder %s120, %s121
      %p130 = scmp.eq.s32.totalorder %s26, 0
      %p131 = por %p129, %p130
      %p132 = scmp.ne.s32.totalorder %s120, %s121
      %p133 = scmp.eq.s32.totalorder %s27, 1
      %p134 = por %p132, %p133
      %p136 = scmp.ne.s32.totalorder %s121, %s135
      %p137 = scmp.eq.s32.totalorder %s27, 0
      %p138 = por %p136, %p137
      %s140 = sadd.s32 %s139, 1
      %p143 = scmp.eq.s32.totalorder %s21, 1
      %p144 = scmp.ne.s32.totalorder %s139, %s141
      %p145 = scmp.eq.s32.totalorder %s21, 0
      %p146 = por %p144, %p145
      %p147 = scmp.ne.s32.totalorder %s139, %s141
      %p148 = scmp.eq.s32.totalorder %s26, 1
      %p149 = por %p147, %p148
      %p150 = scmp.ne.s32.totalorder %s141, %s142
      %p151 = scmp.eq.s32.totalorder %s26, 0
      %p152 = por %p150, %p151
      %p153 = scmp.ne.s32.totalorder %s141, %s142
      %p154 = scmp.eq.s32.totalorder %s27, 1
      %p155 = por %p153, %p154
      %p157 = scmp.ne.s32.totalorder %s142, %s156
      %p158 = scmp.eq.s32.totalorder %s27, 0
      %p159 = por %p157, %p158
      %s160 = ssub.s32 %s21, %s28
      %p161 = scmp.eq.s32.totalorder %s160, 0
      %s163 = sadd.s32 %s162, 1
      %s164 = scalar_select %p161, %s162, %s163
      %p167 = pneg %p161
      %p168 = scmp.eq.s32.totalorder %s21, 1
      %p169 = por %p167, %p168
      %p170 = scmp.ne.s32.totalorder %s162, %s165
      %p171 = scmp.eq.s32.totalorder %s21, 0
      %p172 = por %p170, %p171
      %p173 = scmp.ne.s32.totalorder %s162, %s165
      %p174 = scmp.eq.s32.totalorder %s26, 1
      %p175 = por %p173, %p174
      %p176 = scmp.ne.s32.totalorder %s165, %s166
      %p177 = scmp.eq.s32.totalorder %s26, 0
      %p178 = por %p176, %p177
      %p179 = scmp.ne.s32.totalorder %s165, %s166
      %p180 = scmp.eq.s32.totalorder %s27, 1
      %p181 = por %p179, %p180
      %p183 = scmp.ne.s32.totalorder %s166, %s182
      %p184 = scmp.eq.s32.totalorder %s27, 0
      %p185 = por %p183, %p184
      %s186 = ssub.s32 %s21, %s28
      %p187 = scmp.eq.s32.totalorder %s186, 0
      %s189 = sadd.s32 %s188, 1
      %s190 = scalar_select %p187, %s188, %s189
      %p193 = pneg %p187
      %p194 = scmp.eq.s32.totalorder %s21, 1
      %p195 = por %p193, %p194
      %p196 = scmp.ne.s32.totalorder %s188, %s191
      %p197 = scmp.eq.s32.totalorder %s21, 0
      %p198 = por %p196, %p197
      %p199 = scmp.ne.s32.totalorder %s188, %s191
      %p200 = scmp.eq.s32.totalorder %s26, 1
      %p201 = por %p199, %p200
      %p202 = scmp.ne.s32.totalorder %s191, %s192
      %p203 = scmp.eq.s32.totalorder %s26, 0
      %p204 = por %p202, %p203
      %p205 = scmp.ne.s32.totalorder %s191, %s192
      %p206 = scmp.eq.s32.totalorder %s27, 1
      %p207 = por %p205, %p206
      %p209 = scmp.ne.s32.totalorder %s192, %s208
      %p210 = scmp.eq.s32.totalorder %s27, 0
      %p211 = por %p209, %p210
      %p212 = scmp.le.s32.totalorder 1, %s21
      %p213 = scmp.lt.s32.totalorder %s21, 3
      %p214 = pnand %p212, %p213
      %p215 = pneg %p214
      // Predicated region
      $region9: #{tpu_custom_call.1} parent=5 // pred_check
        _
      $region10: #{tpu_custom_call.1} parent=5 // pred_check_branch
        %217 = sbr.rel (%p214) target = $region12
      $region11: #{tpu_custom_call.1} parent=5 // pred_region
        %s218 = ssub.s32 %s21, 1
        // Predicated region
        $region13: #{tpu_custom_call.1} parent=11 // pred_check
          %p219 = pneg %p68
        $region14: #{tpu_custom_call.1} parent=11 // pred_check_branch
          %221 = sbr.rel (%p219) target = $region16
        $region15: #{tpu_custom_call.1} parent=11 // pred_region
          _
        $region16: #{tpu_custom_call.1} parent=11 // pred_fallthru
          _
        // Predicated region
        $region17: #{tpu_custom_call.1} parent=11 // pred_check
          %p222 = pneg %p89
        $region18: #{tpu_custom_call.1} parent=11 // pred_check_branch
          %224 = sbr.rel (%p222) target = $region20
        $region19: #{tpu_custom_call.1} parent=11 // pred_region
          _
        $region20: #{tpu_custom_call.1} parent=11 // pred_fallthru
          _
        // Predicated region
        $region21: #{tpu_custom_call.1} parent=11 // pred_check
          %p225 = pneg %p110
        $region22: #{tpu_custom_call.1} parent=11 // pred_check_branch
          %227 = sbr.rel (%p225) target = $region24
        $region23: #{tpu_custom_call.1} parent=11 // pred_region
          _
        $region24: #{tpu_custom_call.1} parent=11 // pred_fallthru
          _
        // Predicated region
        $region25: #{tpu_custom_call.1} parent=11 // pred_check
          %p228 = pneg %p131
        $region26: #{tpu_custom_call.1} parent=11 // pred_check_branch
          %230 = sbr.rel (%p228) target = $region28
        $region27: #{tpu_custom_call.1} parent=11 // pred_region
          _
        $region28: #{tpu_custom_call.1} parent=11 // pred_fallthru
          _
        // Predicated region
        $region29: #{tpu_custom_call.1} parent=11 // pred_check
          %p231 = pneg %p152
        $region30: #{tpu_custom_call.1} parent=11 // pred_check_branch
          %233 = sbr.rel (%p231) target = $region32
        $region31: #{tpu_custom_call.1} parent=11 // pred_region
          _
        $region32: #{tpu_custom_call.1} parent=11 // pred_fallthru
          _
      $region12: #{tpu_custom_call.1} parent=5 // pred_fallthru
        _
      %p234 = scmp.lt.s32.totalorder %s21, 2
      // Predicated region
      $region33: #{tpu_custom_call.1} parent=5 // pred_check
        %p235 = pneg %p234
      $region34: #{tpu_custom_call.1} parent=5 // pred_check_branch
        %237 = sbr.rel (%p235) target = $region36
      $region35: #{tpu_custom_call.1} parent=5 // pred_region
        // Predicated region
        $region37: #{tpu_custom_call.1} parent=35 // pred_check
          %p238 = pneg %p41
        $region38: #{tpu_custom_call.1} parent=35 // pred_check_branch
          %240 = sbr.rel (%p238) target = $region40
        $region39: #{tpu_custom_call.1} parent=35 // pred_region
          %p241 = scmp.lt.s32.totalorder %s21, 1
          %s242 = scalar_select %p241, %s21, 1
          %s243 = smul.addr %s242, 4
          %s244 = smul.addr %s243, 4
          %s245 = scalar_lea.vmem %s0, %s244
        $region40: #{tpu_custom_call.1} parent=35 // pred_fallthru
          _
      $region36: #{tpu_custom_call.1} parent=5 // pred_fallthru
        _
      %p246 = scmp.le.s32.totalorder 1, %s21
      %p247 = scmp.lt.s32.totalorder %s21, 3
      %p248 = pnand %p246, %p247
      %p249 = pneg %p248
      // Predicated region
      $region41: #{tpu_custom_call.1} parent=5 // pred_check
        _
      $region42: #{tpu_custom_call.1} parent=5 // pred_check_branch
        %251 = sbr.rel (%p248) target = $region44
      $region43: #{tpu_custom_call.1} parent=5 // pred_region
        %s252 = ssub.s32 %s21, 1
        %p253 = scmp.lt.s32.totalorder %s26, 1
        %s254 = scalar_select %p253, %s26, 1
        %s255 = smul.addr %s254, 4
        %s256 = smul.addr %s255, 4
        %s257 = scalar_lea.vmem %s0, %s256
        %p258 = pneg %p47
        %p259 = pneg %p44
        %p260 = pneg %p68
        %p261 = pneg %p65
        %p262 = pneg %p89
        %p263 = pneg %p86
        %p264 = pneg %p110
        %p265 = pneg %p107
        %p266 = pneg %p131
        %p267 = pneg %p128
        %p268 = pneg %p152
        %p269 = pneg %p149
        %p270 = pneg %p178
        %p271 = pneg %p175
        %s272 = sand.u32 %s165, 1
        %s273 = scalar_lea.sflag [#allocation4], %s272
        %s274 = sand.u32 %s165, 1
        %s275 = smul.addr %s274, 24
        %s276 = scalar_lea.vmem [#allocation3], %s275
        %p277 = pneg %p204
        %p278 = pneg %p201
        %s279 = sand.u32 %s191, 1
        %s280 = scalar_lea.sflag [#allocation6], %s279
        %s281 = sand.u32 %s191, 1
        %s282 = smul.addr %s281, 3
        %s283 = scalar_lea.vmem [#allocation5], %s282
        %p284 = scmp.lt.s32.totalorder %s26, 1
        %s285 = scalar_select %p284, %s26, 1
        %s286 = smul.addr %s285, 4
        %s287 = smul.addr %s286, 4
        %s288 = scalar_lea.vmem %s0, %s287
        %v289 = vld [vmem:[%s288] sm:$0xff]
        %v290 = vld [vmem:[%s288 + $0x8] sm:$0xf]
        %v291 = vld [vmem:[%s288] sm:$0xff]
        %v292 = vld [vmem:[%s288 + $0x8] sm:$0xff]
        %v293 = vld [vmem:[%s1] sm:$0xff]
        %v294 = vld [vmem:[%s2] sm:$0x1]
        %s295 = scalar_lea.vmem %s1, 8
        %v296 = vld [vmem:[%s295] sm:$0xff]
        %299 = vst [vmem:[#allocation1] ss:$2 sm:$0xff] %v291
        %s300 = scalar_lea.vmem [#allocation1], 16
        %301 = vst [vmem:[%s300] ss:$2 sm:$0xff] %v292
        %v302 = vld.sshfl [vmem:[#allocation1] sm:$0xff pattern:$0x75316420]
        %v303 = vld.sshfl [vmem:[#allocation1 + $0x8] sm:$0xff pattern:$0x75316420]
        %v304 = vld.sshfl [vmem:[#allocation1 + $0x10] sm:$0xff pattern:$0x75316420]
        %v305 = vld.sshfl [vmem:[#allocation1 + $0x18] sm:$0xff pattern:$0x75316420]
        %306 = vrot.lane.b32.xlu0 %v302, 126
        %v307 = vpop.permute.xlu0 %306
        %308 = vrot.lane.b32.xlu0 %v303, 126
        %v309 = vpop.permute.xlu0 %308
        %310 = vrot.lane.b32.xlu0 %v304, 126
        %v311 = vpop.permute.xlu0 %310
        %312 = vrot.lane.b32.xlu0 %v305, 126
        %v313 = vpop.permute.xlu0 %312
        %vm314 = vcmask 1031168
        %v315 = vsel %vm314, %v307, %v309
        %v316 = vsel %vm314, %v309, %v311
        %v317 = vsel %vm314, %v311, %v313
        %vm318 = vcmask 31744
        %v320 = vsel %vm318, %v296, 0
        %vm322 = vcmask 1043456
        %v323 = vsel %vm322, %v315, 0
        %v325 = vsel %vm322, %v316, 0
        %v327 = vsel %vm322, %v317, 0
        %329 = vmatpush.msra.mxu0 0.0
        %330 = vmatpush.msra.mxu0 0.0
        %331 = vmatpush.msra.mxu0 0.0
        %332 = vmatpush.msra.mxu0 0.0
        %333 = vmatpush.msra.mxu0 0.0
        %334 = vmatpush.msra.mxu0 0.0
        %335 = vmatpush.msra.mxu0 0.0
        %336 = vmatpush.msra.mxu0 0.0
        %337 = vmatpush.msra.mxu0 0.0
        %338 = vmatpush.msra.mxu0 0.0
        %339 = vmatpush.msra.mxu0 0.0
        %340 = vmatpush.msra.mxu0 0.0
        %341 = vmatpush.msra.mxu0 0.0
        %342 = vmatpush.msra.mxu0 0.0
        %343 = vmatpush.msra.mxu0 0.0
        %344 = vmatpush.msra.mxu0 %v323
        %345 = vmatmul.f32.gmra.mxu0 %v320
        %v346 = vpop.f32.mrf.mxu0
        %v347 = vadd.f32 0.0, %v346
        %348 = vdwg.mxu0
        %349 = vmatpush.msra.mxu0 0.0
        %350 = vmatpush.msra.mxu0 0.0
        %351 = vmatpush.msra.mxu0 0.0
        %352 = vmatpush.msra.mxu0 0.0
        %353 = vmatpush.msra.mxu0 0.0
        %354 = vmatpush.msra.mxu0 0.0
        %355 = vmatpush.msra.mxu0 0.0
        %356 = vmatpush.msra.mxu0 0.0
        %357 = vmatpush.msra.mxu0 0.0
        %358 = vmatpush.msra.mxu0 0.0
        %359 = vmatpush.msra.mxu0 0.0
        %360 = vmatpush.msra.mxu0 0.0
        %361 = vmatpush.msra.mxu0 0.0
        %362 = vmatpush.msra.mxu0 0.0
        %363 = vmatpush.msra.mxu0 0.0
        %364 = vmatpush.msra.mxu0 %v325
        %365 = vmatmul.f32.gmra.mxu0 %v320
        %v366 = vpop.f32.mrf.mxu0
        %v367 = vadd.f32 0.0, %v366
        %368 = vdwg.mxu0
        %369 = vmatpush.msra.mxu0 0.0
        %370 = vmatpush.msra.mxu0 0.0
        %371 = vmatpush.msra.mxu0 0.0
        %372 = vmatpush.msra.mxu0 0.0
        %373 = vmatpush.msra.mxu0 0.0
        %374 = vmatpush.msra.mxu0 0.0
        %375 = vmatpush.msra.mxu0 0.0
        %376 = vmatpush.msra.mxu0 0.0
        %377 = vmatpush.msra.mxu0 0.0
        %378 = vmatpush.msra.mxu0 0.0
        %379 = vmatpush.msra.mxu0 0.0
        %380 = vmatpush.msra.mxu0 0.0
        %381 = vmatpush.msra.mxu0 0.0
        %382 = vmatpush.msra.mxu0 0.0
        %383 = vmatpush.msra.mxu0 0.0
        %384 = vmatpush.msra.mxu0 %v327
        %385 = vmatmul.f32.gmra.mxu0 %v320
        %v386 = vpop.f32.mrf.mxu0
        %v387 = vadd.f32 0.0, %v386
        %388 = vdwg.mxu0
        %391 = vst [vmem:[#allocation1] ss:$2 sm:$0xff] %v289
        %s392 = scalar_lea.vmem [#allocation1], 16
        %393 = vst [vmem:[%s392] ss:$2 sm:$0xff] %v290
        %v394 = vld.sshfl [vmem:[#allocation1] sm:$0xff pattern:$0x75316420]
        %v395 = vld.sshfl [vmem:[#allocation1 + $0x8] sm:$0xff pattern:$0x75316420]
        %v396 = vld.sshfl [vmem:[#allocation1 + $0x10] sm:$0xff pattern:$0x75316420]
        %v398 = vsel %vm318, %v293, 0
        %v400 = vsel %vm322, %v394, 0
        %v402 = vsel %vm322, %v395, 0
        %v404 = vsel %vm322, %v396, 0
        %406 = vmatpush.msra.mxu0 0.0
        %407 = vmatpush.msra.mxu0 0.0
        %408 = vmatpush.msra.mxu0 0.0
        %409 = vmatpush.msra.mxu0 0.0
        %410 = vmatpush.msra.mxu0 0.0
        %411 = vmatpush.msra.mxu0 0.0
        %412 = vmatpush.msra.mxu0 0.0
        %413 = vmatpush.msra.mxu0 0.0
        %414 = vmatpush.msra.mxu0 0.0
        %415 = vmatpush.msra.mxu0 0.0
        %416 = vmatpush.msra.mxu0 0.0
        %417 = vmatpush.msra.mxu0 0.0
        %418 = vmatpush.msra.mxu0 0.0
        %419 = vmatpush.msra.mxu0 0.0
        %420 = vmatpush.msra.mxu0 0.0
        %421 = vmatpush.msra.mxu0 %v400
        %422 = vmatmul.f32.gmra.mxu0 %v398
        %v423 = vpop.f32.mrf.mxu0
        %v424 = vadd.f32 %v347, %v423
        %425 = vdwg.mxu0
        %426 = vmatpush.msra.mxu0 0.0
        %427 = vmatpush.msra.mxu0 0.0
        %428 = vmatpush.msra.mxu0 0.0
        %429 = vmatpush.msra.mxu0 0.0
        %430 = vmatpush.msra.mxu0 0.0
        %431 = vmatpush.msra.mxu0 0.0
        %432 = vmatpush.msra.mxu0 0.0
        %433 = vmatpush.msra.mxu0 0.0
        %434 = vmatpush.msra.mxu0 0.0
        %435 = vmatpush.msra.mxu0 0.0
        %436 = vmatpush.msra.mxu0 0.0
        %437 = vmatpush.msra.mxu0 0.0
        %438 = vmatpush.msra.mxu0 0.0
        %439 = vmatpush.msra.mxu0 0.0
        %440 = vmatpush.msra.mxu0 0.0
        %441 = vmatpush.msra.mxu0 %v402
        %442 = vmatmul.f32.gmra.mxu0 %v398
        %v443 = vpop.f32.mrf.mxu0
        %v444 = vadd.f32 %v367, %v443
        %445 = vdwg.mxu0
        %446 = vmatpush.msra.mxu0 0.0
        %447 = vmatpush.msra.mxu0 0.0
        %448 = vmatpush.msra.mxu0 0.0
        %449 = vmatpush.msra.mxu0 0.0
        %450 = vmatpush.msra.mxu0 0.0
        %451 = vmatpush.msra.mxu0 0.0
        %452 = vmatpush.msra.mxu0 0.0
        %453 = vmatpush.msra.mxu0 0.0
        %454 = vmatpush.msra.mxu0 0.0
        %455 = vmatpush.msra.mxu0 0.0
        %456 = vmatpush.msra.mxu0 0.0
        %457 = vmatpush.msra.mxu0 0.0
        %458 = vmatpush.msra.mxu0 0.0
        %459 = vmatpush.msra.mxu0 0.0
        %460 = vmatpush.msra.mxu0 0.0
        %461 = vmatpush.msra.mxu0 %v404
        %462 = vmatmul.f32.gmra.mxu0 %v398
        %v463 = vpop.f32.mrf.mxu0
        %v464 = vadd.f32 %v387, %v463
        %465 = vdwg.mxu0
        %s466 = scalar_lea.vmem %s2, 1
        %v467 = vld [vmem:[%s466] sm:$0x1]
        %468 = vst [vmem:[#allocation1] ss:$2 sm:$0xff] %v291
        %s469 = scalar_lea.vmem [#allocation1], 16
        %470 = vst [vmem:[%s469] ss:$2 sm:$0xff] %v292
        %v471 = vld.sshfl [vmem:[#allocation1] sm:$0xff pattern:$0x75316420]
        %v472 = vld.sshfl [vmem:[#allocation1 + $0x8] sm:$0xff pattern:$0x75316420]
        %v473 = vld.sshfl [vmem:[#allocation1 + $0x10] sm:$0xff pattern:$0x75316420]
        %v474 = vld.sshfl [vmem:[#allocation1 + $0x18] sm:$0xff pattern:$0x75316420]
        %475 = vrot.lane.b32.xlu0 %v471, 102
        %v476 = vpop.permute.xlu0 %475
        %477 = vrot.lane.b32.xlu0 %v472, 102
        %v478 = vpop.permute.xlu0 %477
        %479 = vrot.lane.b32.xlu0 %v473, 102
        %v480 = vpop.permute.xlu0 %479
        %481 = vrot.lane.b32.xlu0 %v474, 102
        %v482 = vpop.permute.xlu0 %481
        %vm483 = vcmask 834560
        %v484 = vsel %vm483, %v476, %v478
        %v485 = vsel %vm483, %v478, %v480
        %v486 = vsel %vm483, %v480, %v482
        %v488 = vsel %vm318, %v467, 0
        %v490 = vsel %vm322, %v484, 0
        %v492 = vsel %vm322, %v485, 0
        %v494 = vsel %vm322, %v486, 0
        %496 = vmatpush.msra.mxu0 0.0
        %497 = vmatpush.msra.mxu0 0.0
        %498 = vmatpush.msra.mxu0 0.0
        %499 = vmatpush.msra.mxu0 0.0
        %500 = vmatpush.msra.mxu0 0.0
        %501 = vmatpush.msra.mxu0 0.0
        %502 = vmatpush.msra.mxu0 0.0
        %503 = vmatpush.msra.mxu0 0.0
        %504 = vmatpush.msra.mxu0 0.0
        %505 = vmatpush.msra.mxu0 0.0
        %506 = vmatpush.msra.mxu0 0.0
        %507 = vmatpush.msra.mxu0 0.0
        %508 = vmatpush.msra.mxu0 0.0
        %509 = vmatpush.msra.mxu0 0.0
        %510 = vmatpush.msra.mxu0 0.0
        %511 = vmatpush.msra.mxu0 %v490
        %512 = vmatmul.f32.gmra.mxu0 %v488
        %v513 = vpop.f32.mrf.mxu0
        %v514 = vadd.f32 0.0, %v513
        %515 = vdwg.mxu0
        %516 = vmatpush.msra.mxu0 0.0
        %517 = vmatpush.msra.mxu0 0.0
        %518 = vmatpush.msra.mxu0 0.0
        %519 = vmatpush.msra.mxu0 0.0
        %520 = vmatpush.msra.mxu0 0.0
        %521 = vmatpush.msra.mxu0 0.0
        %522 = vmatpush.msra.mxu0 0.0
        %523 = vmatpush.msra.mxu0 0.0
        %524 = vmatpush.msra.mxu0 0.0
        %525 = vmatpush.msra.mxu0 0.0
        %526 = vmatpush.msra.mxu0 0.0
        %527 = vmatpush.msra.mxu0 0.0
        %528 = vmatpush.msra.mxu0 0.0
        %529 = vmatpush.msra.mxu0 0.0
        %530 = vmatpush.msra.mxu0 0.0
        %531 = vmatpush.msra.mxu0 %v492
        %532 = vmatmul.f32.gmra.mxu0 %v488
        %v533 = vpop.f32.mrf.mxu0
        %v534 = vadd.f32 0.0, %v533
        %535 = vdwg.mxu0
        %536 = vmatpush.msra.mxu0 0.0
        %537 = vmatpush.msra.mxu0 0.0
        %538 = vmatpush.msra.mxu0 0.0
        %539 = vmatpush.msra.mxu0 0.0
        %540 = vmatpush.msra.mxu0 0.0
        %541 = vmatpush.msra.mxu0 0.0
        %542 = vmatpush.msra.mxu0 0.0
        %543 = vmatpush.msra.mxu0 0.0
        %544 = vmatpush.msra.mxu0 0.0
        %545 = vmatpush.msra.mxu0 0.0
        %546 = vmatpush.msra.mxu0 0.0
        %547 = vmatpush.msra.mxu0 0.0
        %548 = vmatpush.msra.mxu0 0.0
        %549 = vmatpush.msra.mxu0 0.0
        %550 = vmatpush.msra.mxu0 0.0
        %551 = vmatpush.msra.mxu0 %v494
        %552 = vmatmul.f32.gmra.mxu0 %v488
        %v553 = vpop.f32.mrf.mxu0
        %v554 = vadd.f32 0.0, %v553
        %555 = vdwg.mxu0
        %556 = vst [vmem:[#allocation1] ss:$2 sm:$0xff] %v291
        %s557 = scalar_lea.vmem [#allocation1], 16
        %558 = vst [vmem:[%s557] ss:$2 sm:$0xff] %v292
        %v559 = vld.sshfl [vmem:[#allocation1] sm:$0xff pattern:$0x75316420]
        %v560 = vld.sshfl [vmem:[#allocation1 + $0x8] sm:$0xff pattern:$0x75316420]
        %v561 = vld.sshfl [vmem:[#allocation1 + $0x10] sm:$0xff pattern:$0x75316420]
        %v562 = vld.sshfl [vmem:[#allocation1 + $0x18] sm:$0xff pattern:$0x75316420]
        %563 = vrot.lane.b32.xlu0 %v559, 103
        %v564 = vpop.permute.xlu0 %563
        %565 = vrot.lane.b32.xlu0 %v560, 103
        %v566 = vpop.permute.xlu0 %565
        %567 = vrot.lane.b32.xlu0 %v561, 103
        %v568 = vpop.permute.xlu0 %567
        %569 = vrot.lane.b32.xlu0 %v562, 103
        %v570 = vpop.permute.xlu0 %569
        %vm571 = vcmask 842752
        %v572 = vsel %vm571, %v564, %v566
        %v573 = vsel %vm571, %v566, %v568
        %v574 = vsel %vm571, %v568, %v570
        %v576 = vsel %vm318, %v294, 0
        %v578 = vsel %vm322, %v572, 0
        %v580 = vsel %vm322, %v573, 0
        %v582 = vsel %vm322, %v574, 0
        %584 = vmatpush.msra.mxu0 0.0
        %585 = vmatpush.msra.mxu0 0.0
        %586 = vmatpush.msra.mxu0 0.0
        %587 = vmatpush.msra.mxu0 0.0
        %588 = vmatpush.msra.mxu0 0.0
        %589 = vmatpush.msra.mxu0 0.0
        %590 = vmatpush.msra.mxu0 0.0
        %591 = vmatpush.msra.mxu0 0.0
        %592 = vmatpush.msra.mxu0 0.0
        %593 = vmatpush.msra.mxu0 0.0
        %594 = vmatpush.msra.mxu0 0.0
        %595 = vmatpush.msra.mxu0 0.0
        %596 = vmatpush.msra.mxu0 0.0
        %597 = vmatpush.msra.mxu0 0.0
        %598 = vmatpush.msra.mxu0 0.0
        %599 = vmatpush.msra.mxu0 %v578
        %600 = vmatmul.f32.gmra.mxu0 %v576
        %v601 = vpop.f32.mrf.mxu0
        %v602 = vadd.f32 %v514, %v601
        %603 = vdwg.mxu0
        %604 = vmatpush.msra.mxu0 0.0
        %605 = vmatpush.msra.mxu0 0.0
        %606 = vmatpush.msra.mxu0 0.0
        %607 = vmatpush.msra.mxu0 0.0
        %608 = vmatpush.msra.mxu0 0.0
        %609 = vmatpush.msra.mxu0 0.0
        %610 = vmatpush.msra.mxu0 0.0
        %611 = vmatpush.msra.mxu0 0.0
        %612 = vmatpush.msra.mxu0 0.0
        %613 = vmatpush.msra.mxu0 0.0
        %614 = vmatpush.msra.mxu0 0.0
        %615 = vmatpush.msra.mxu0 0.0
        %616 = vmatpush.msra.mxu0 0.0
        %617 = vmatpush.msra.mxu0 0.0
        %618 = vmatpush.msra.mxu0 0.0
        %619 = vmatpush.msra.mxu0 %v580
        %620 = vmatmul.f32.gmra.mxu0 %v576
        %v621 = vpop.f32.mrf.mxu0
        %v622 = vadd.f32 %v534, %v621
        %623 = vdwg.mxu0
        %624 = vmatpush.msra.mxu0 0.0
        %625 = vmatpush.msra.mxu0 0.0
        %626 = vmatpush.msra.mxu0 0.0
        %627 = vmatpush.msra.mxu0 0.0
        %628 = vmatpush.msra.mxu0 0.0
        %629 = vmatpush.msra.mxu0 0.0
        %630 = vmatpush.msra.mxu0 0.0
        %631 = vmatpush.msra.mxu0 0.0
        %632 = vmatpush.msra.mxu0 0.0
        %633 = vmatpush.msra.mxu0 0.0
        %634 = vmatpush.msra.mxu0 0.0
        %635 = vmatpush.msra.mxu0 0.0
        %636 = vmatpush.msra.mxu0 0.0
        %637 = vmatpush.msra.mxu0 0.0
        %638 = vmatpush.msra.mxu0 0.0
        %639 = vmatpush.msra.mxu0 %v582
        %640 = vmatmul.f32.gmra.mxu0 %v576
        %v641 = vpop.f32.mrf.mxu0
        %v642 = vadd.f32 %v554, %v641
        %643 = vdwg.mxu0
        %v644 = vld [vmem:[%s288] sm:$0xff]
        %v645 = vld [vmem:[%s288 + $0x8] sm:$0xff]
        %s646 = scalar_lea.vmem %s1, 16
        %v647 = vld [vmem:[%s646] sm:$0xff]
        %650 = vst [vmem:[#allocation1] ss:$2 sm:$0xff] %v644
        %s651 = scalar_lea.vmem [#allocation1], 16
        %652 = vst [vmem:[%s651] ss:$2 sm:$0xff] %v645
        %v653 = vld.sshfl [vmem:[#allocation1] sm:$0xff pattern:$0x75316420]
        %v654 = vld.sshfl [vmem:[#allocation1 + $0x8] sm:$0xff pattern:$0x75316420]
        %v655 = vld.sshfl [vmem:[#allocation1 + $0x10] sm:$0xff pattern:$0x75316420]
        %v656 = vld.sshfl [vmem:[#allocation1 + $0x18] sm:$0xff pattern:$0x75316420]
        %657 = vrot.lane.b32.xlu0 %v653, 124
        %v658 = vpop.permute.xlu0 %657
        %659 = vrot.lane.b32.xlu0 %v654, 124
        %v660 = vpop.permute.xlu0 %659
        %661 = vrot.lane.b32.xlu0 %v655, 124
        %v662 = vpop.permute.xlu0 %661
        %663 = vrot.lane.b32.xlu0 %v656, 124
        %v664 = vpop.permute.xlu0 %663
        %vm665 = vcmask 1014784
        %v666 = vsel %vm665, %v658, %v660
        %v667 = vsel %vm665, %v660, %v662
        %v668 = vsel %vm665, %v662, %v664
        %v670 = vsel %vm318, %v647, 0
        %v672 = vsel %vm322, %v666, 0
        %v674 = vsel %vm322, %v667, 0
        %v676 = vsel %vm322, %v668, 0
        %678 = vmatpush.msra.mxu0 0.0
        %679 = vmatpush.msra.mxu0 0.0
        %680 = vmatpush.msra.mxu0 0.0
        %681 = vmatpush.msra.mxu0 0.0
        %682 = vmatpush.msra.mxu0 0.0
        %683 = vmatpush.msra.mxu0 0.0
        %684 = vmatpush.msra.mxu0 0.0
        %685 = vmatpush.msra.mxu0 0.0
        %686 = vmatpush.msra.mxu0 0.0
        %687 = vmatpush.msra.mxu0 0.0
        %688 = vmatpush.msra.mxu0 0.0
        %689 = vmatpush.msra.mxu0 0.0
        %690 = vmatpush.msra.mxu0 0.0
        %691 = vmatpush.msra.mxu0 0.0
        %692 = vmatpush.msra.mxu0 0.0
        %693 = vmatpush.msra.mxu0 %v672
        %694 = vmatmul.f32.gmra.mxu0 %v670
        %v695 = vpop.f32.mrf.mxu0
        %v696 = vadd.f32 0.0, %v695
        %697 = vdwg.mxu0
        %698 = vmatpush.msra.mxu0 0.0
        %699 = vmatpush.msra.mxu0 0.0
        %700 = vmatpush.msra.mxu0 0.0
        %701 = vmatpush.msra.mxu0 0.0
        %702 = vmatpush.msra.mxu0 0.0
        %703 = vmatpush.msra.mxu0 0.0
        %704 = vmatpush.msra.mxu0 0.0
        %705 = vmatpush.msra.mxu0 0.0
        %706 = vmatpush.msra.mxu0 0.0
        %707 = vmatpush.msra.mxu0 0.0
        %708 = vmatpush.msra.mxu0 0.0
        %709 = vmatpush.msra.mxu0 0.0
        %710 = vmatpush.msra.mxu0 0.0
        %711 = vmatpush.msra.mxu0 0.0
        %712 = vmatpush.msra.mxu0 0.0
        %713 = vmatpush.msra.mxu0 %v674
        %714 = vmatmul.f32.gmra.mxu0 %v670
        %v715 = vpop.f32.mrf.mxu0
        %v716 = vadd.f32 0.0, %v715
        %717 = vdwg.mxu0
        %718 = vmatpush.msra.mxu0 0.0
        %719 = vmatpush.msra.mxu0 0.0
        %720 = vmatpush.msra.mxu0 0.0
        %721 = vmatpush.msra.mxu0 0.0
        %722 = vmatpush.msra.mxu0 0.0
        %723 = vmatpush.msra.mxu0 0.0
        %724 = vmatpush.msra.mxu0 0.0
        %725 = vmatpush.msra.mxu0 0.0
        %726 = vmatpush.msra.mxu0 0.0
        %727 = vmatpush.msra.mxu0 0.0
        %728 = vmatpush.msra.mxu0 0.0
        %729 = vmatpush.msra.mxu0 0.0
        %730 = vmatpush.msra.mxu0 0.0
        %731 = vmatpush.msra.mxu0 0.0
        %732 = vmatpush.msra.mxu0 0.0
        %733 = vmatpush.msra.mxu0 %v676
        %734 = vmatmul.f32.gmra.mxu0 %v670
        %v735 = vpop.f32.mrf.mxu0
        %v736 = vadd.f32 0.0, %v735
        %737 = vdwg.mxu0
        %v738 = vadd.f32 %v424, %v696
        %v739 = vadd.f32 %v444, %v716
        %v740 = vadd.f32 %v464, %v736
        %s741 = scalar_lea.vmem %s2, 2
        %v742 = vld [vmem:[%s741] sm:$0x1]
        %743 = vst [vmem:[#allocation1] ss:$2 sm:$0xff] %v644
        %s744 = scalar_lea.vmem [#allocation1], 16
        %745 = vst [vmem:[%s744] ss:$2 sm:$0xff] %v645
        %v746 = vld.sshfl [vmem:[#allocation1] sm:$0xff pattern:$0x75316420]
        %v747 = vld.sshfl [vmem:[#allocation1 + $0x8] sm:$0xff pattern:$0x75316420]
        %v748 = vld.sshfl [vmem:[#allocation1 + $0x10] sm:$0xff pattern:$0x75316420]
        %v749 = vld.sshfl [vmem:[#allocation1 + $0x18] sm:$0xff pattern:$0x75316420]
        %750 = vrot.lane.b32.xlu0 %v746, 101
        %v751 = vpop.permute.xlu0 %750
        %752 = vrot.lane.b32.xlu0 %v747, 101
        %v753 = vpop.permute.xlu0 %752
        %754 = vrot.lane.b32.xlu0 %v748, 101
        %v755 = vpop.permute.xlu0 %754
        %756 = vrot.lane.b32.xlu0 %v749, 101
        %v757 = vpop.permute.xlu0 %756
        %vm758 = vcmask 826368
        %v759 = vsel %vm758, %v751, %v753
        %v760 = vsel %vm758, %v753, %v755
        %v761 = vsel %vm758, %v755, %v757
        %v763 = vsel %vm318, %v742, 0
        %v765 = vsel %vm322, %v759, 0
        %v767 = vsel %vm322, %v760, 0
        %v769 = vsel %vm322, %v761, 0
        %771 = vmatpush.msra.mxu0 0.0
        %772 = vmatpush.msra.mxu0 0.0
        %773 = vmatpush.msra.mxu0 0.0
        %774 = vmatpush.msra.mxu0 0.0
        %775 = vmatpush.msra.mxu0 0.0
        %776 = vmatpush.msra.mxu0 0.0
        %777 = vmatpush.msra.mxu0 0.0
        %778 = vmatpush.msra.mxu0 0.0
        %779 = vmatpush.msra.mxu0 0.0
        %780 = vmatpush.msra.mxu0 0.0
        %781 = vmatpush.msra.mxu0 0.0
        %782 = vmatpush.msra.mxu0 0.0
        %783 = vmatpush.msra.mxu0 0.0
        %784 = vmatpush.msra.mxu0 0.0
        %785 = vmatpush.msra.mxu0 0.0
        %786 = vmatpush.msra.mxu0 %v765
        %787 = vmatmul.f32.gmra.mxu0 %v763
        %v788 = vpop.f32.mrf.mxu0
        %v789 = vadd.f32 0.0, %v788
        %790 = vdwg.mxu0
        %791 = vmatpush.msra.mxu0 0.0
        %792 = vmatpush.msra.mxu0 0.0
        %793 = vmatpush.msra.mxu0 0.0
        %794 = vmatpush.msra.mxu0 0.0
        %795 = vmatpush.msra.mxu0 0.0
        %796 = vmatpush.msra.mxu0 0.0
        %797 = vmatpush.msra.mxu0 0.0
        %798 = vmatpush.msra.mxu0 0.0
        %799 = vmatpush.msra.mxu0 0.0
        %800 = vmatpush.msra.mxu0 0.0
        %801 = vmatpush.msra.mxu0 0.0
        %802 = vmatpush.msra.mxu0 0.0
        %803 = vmatpush.msra.mxu0 0.0
        %804 = vmatpush.msra.mxu0 0.0
        %805 = vmatpush.msra.mxu0 0.0
        %806 = vmatpush.msra.mxu0 %v767
        %807 = vmatmul.f32.gmra.mxu0 %v763
        %v808 = vpop.f32.mrf.mxu0
        %v809 = vadd.f32 0.0, %v808
        %810 = vdwg.mxu0
        %811 = vmatpush.msra.mxu0 0.0
        %812 = vmatpush.msra.mxu0 0.0
        %813 = vmatpush.msra.mxu0 0.0
        %814 = vmatpush.msra.mxu0 0.0
        %815 = vmatpush.msra.mxu0 0.0
        %816 = vmatpush.msra.mxu0 0.0
        %817 = vmatpush.msra.mxu0 0.0
        %818 = vmatpush.msra.mxu0 0.0
        %819 = vmatpush.msra.mxu0 0.0
        %820 = vmatpush.msra.mxu0 0.0
        %821 = vmatpush.msra.mxu0 0.0
        %822 = vmatpush.msra.mxu0 0.0
        %823 = vmatpush.msra.mxu0 0.0
        %824 = vmatpush.msra.mxu0 0.0
        %825 = vmatpush.msra.mxu0 0.0
        %826 = vmatpush.msra.mxu0 %v769
        %827 = vmatmul.f32.gmra.mxu0 %v763
        %v828 = vpop.f32.mrf.mxu0
        %v829 = vadd.f32 0.0, %v828
        %830 = vdwg.mxu0
        %v831 = vadd.f32 %v602, %v789
        %v832 = vadd.f32 %v622, %v809
        %v833 = vadd.f32 %v642, %v829
        %v834 = vld [vmem:[%s288] sm:$0xff]
        %v835 = vld [vmem:[%s288 + $0x8] sm:$0xff]
        %s836 = scalar_lea.vmem %s1, 24
        %v837 = vld [vmem:[%s836] sm:$0xff]
        %840 = vst [vmem:[#allocation1] ss:$2 sm:$0xff] %v834
        %s841 = scalar_lea.vmem [#allocation1], 16
        %842 = vst [vmem:[%s841] ss:$2 sm:$0xff] %v835
        %v843 = vld.sshfl [vmem:[#allocation1] sm:$0xff pattern:$0x75316420]
        %v844 = vld.sshfl [vmem:[#allocation1 + $0x8] sm:$0xff pattern:$0x75316420]
        %v845 = vld.sshfl [vmem:[#allocation1 + $0x10] sm:$0xff pattern:$0x75316420]
        %v846 = vld.sshfl [vmem:[#allocation1 + $0x18] sm:$0xff pattern:$0x75316420]
        %847 = vrot.lane.b32.xlu0 %v843, 80
        %v848 = vpop.permute.xlu0 %847
        %849 = vrot.lane.b32.xlu0 %v844, 80
        %v850 = vpop.permute.xlu0 %849
        %851 = vrot.lane.b32.xlu0 %v845, 80
        %v852 = vpop.permute.xlu0 %851
        %853 = vrot.lane.b32.xlu0 %v846, 80
        %v854 = vpop.permute.xlu0 %853
        %vm855 = vcmask 654336
        %v856 = vsel %vm855, %v848, %v850
        %v857 = vsel %vm855, %v850, %v852
        %v858 = vsel %vm855, %v852, %v854
        %v860 = vsel %vm318, %v837, 0
        %v862 = vsel %vm322, %v856, 0
        %v864 = vsel %vm322, %v857, 0
        %v866 = vsel %vm322, %v858, 0
        %868 = vmatpush.msra.mxu0 0.0
        %869 = vmatpush.msra.mxu0 0.0
        %870 = vmatpush.msra.mxu0 0.0
        %871 = vmatpush.msra.mxu0 0.0
        %872 = vmatpush.msra.mxu0 0.0
        %873 = vmatpush.msra.mxu0 0.0
        %874 = vmatpush.msra.mxu0 0.0
        %875 = vmatpush.msra.mxu0 0.0
        %876 = vmatpush.msra.mxu0 0.0
        %877 = vmatpush.msra.mxu0 0.0
        %878 = vmatpush.msra.mxu0 0.0
        %879 = vmatpush.msra.mxu0 0.0
        %880 = vmatpush.msra.mxu0 0.0
        %881 = vmatpush.msra.mxu0 0.0
        %882 = vmatpush.msra.mxu0 0.0
        %883 = vmatpush.msra.mxu0 %v862
        %884 = vmatmul.f32.gmra.mxu0 %v860
        %v885 = vpop.f32.mrf.mxu0
        %v886 = vadd.f32 0.0, %v885
        %887 = vdwg.mxu0
        %888 = vmatpush.msra.mxu0 0.0
        %889 = vmatpush.msra.mxu0 0.0
        %890 = vmatpush.msra.mxu0 0.0
        %891 = vmatpush.msra.mxu0 0.0
        %892 = vmatpush.msra.mxu0 0.0
        %893 = vmatpush.msra.mxu0 0.0
        %894 = vmatpush.msra.mxu0 0.0
        %895 = vmatpush.msra.mxu0 0.0
        %896 = vmatpush.msra.mxu0 0.0
        %897 = vmatpush.msra.mxu0 0.0
        %898 = vmatpush.msra.mxu0 0.0
        %899 = vmatpush.msra.mxu0 0.0
        %900 = vmatpush.msra.mxu0 0.0
        %901 = vmatpush.msra.mxu0 0.0
        %902 = vmatpush.msra.mxu0 0.0
        %903 = vmatpush.msra.mxu0 %v864
        %904 = vmatmul.f32.gmra.mxu0 %v860
        %v905 = vpop.f32.mrf.mxu0
        %v906 = vadd.f32 0.0, %v905
        %907 = vdwg.mxu0
        %908 = vmatpush.msra.mxu0 0.0
        %909 = vmatpush.msra.mxu0 0.0
        %910 = vmatpush.msra.mxu0 0.0
        %911 = vmatpush.msra.mxu0 0.0
        %912 = vmatpush.msra.mxu0 0.0
        %913 = vmatpush.msra.mxu0 0.0
        %914 = vmatpush.msra.mxu0 0.0
        %915 = vmatpush.msra.mxu0 0.0
        %916 = vmatpush.msra.mxu0 0.0
        %917 = vmatpush.msra.mxu0 0.0
        %918 = vmatpush.msra.mxu0 0.0
        %919 = vmatpush.msra.mxu0 0.0
        %920 = vmatpush.msra.mxu0 0.0
        %921 = vmatpush.msra.mxu0 0.0
        %922 = vmatpush.msra.mxu0 0.0
        %923 = vmatpush.msra.mxu0 %v866
        %924 = vmatmul.f32.gmra.mxu0 %v860
        %v925 = vpop.f32.mrf.mxu0
        %v926 = vadd.f32 0.0, %v925
        %927 = vdwg.mxu0
        %v928 = vadd.f32 %v738, %v886
        %v929 = vadd.f32 %v739, %v906
        %v930 = vadd.f32 %v740, %v926
        %s931 = scalar_lea.vmem %s2, 3
        %v932 = vld [vmem:[%s931] sm:$0x1]
        %933 = vst [vmem:[#allocation1] ss:$2 sm:$0xff] %v834
        %s934 = scalar_lea.vmem [#allocation1], 16
        %935 = vst [vmem:[%s934] ss:$2 sm:$0xff] %v835
        %v936 = vld.sshfl [vmem:[#allocation1] sm:$0xff pattern:$0x75316420]
        %v937 = vld.sshfl [vmem:[#allocation1 + $0x8] sm:$0xff pattern:$0x75316420]
        %v938 = vld.sshfl [vmem:[#allocation1 + $0x10] sm:$0xff pattern:$0x75316420]
        %v939 = vld.sshfl [vmem:[#allocation1 + $0x18] sm:$0xff pattern:$0x75316420]
        %940 = vrot.lane.b32.xlu0 %v936, 79
        %v941 = vpop.permute.xlu0 %940
        %942 = vrot.lane.b32.xlu0 %v937, 79
        %v943 = vpop.permute.xlu0 %942
        %944 = vrot.lane.b32.xlu0 %v938, 79
        %v945 = vpop.permute.xlu0 %944
        %946 = vrot.lane.b32.xlu0 %v939, 79
        %v947 = vpop.permute.xlu0 %946
        %vm948 = vcmask 646144
        %v949 = vsel %vm948, %v941, %v943
        %v950 = vsel %vm948, %v943, %v945
        %v951 = vsel %vm948, %v945, %v947
        %v953 = vsel %vm318, %v932, 0
        %v955 = vsel %vm322, %v949, 0
        %v957 = vsel %vm322, %v950, 0
        %v959 = vsel %vm322, %v951, 0
        %961 = vmatpush.msra.mxu0 0.0
        %962 = vmatpush.msra.mxu0 0.0
        %963 = vmatpush.msra.mxu0 0.0
        %964 = vmatpush.msra.mxu0 0.0
        %965 = vmatpush.msra.mxu0 0.0
        %966 = vmatpush.msra.mxu0 0.0
        %967 = vmatpush.msra.mxu0 0.0
        %968 = vmatpush.msra.mxu0 0.0
        %969 = vmatpush.msra.mxu0 0.0
        %970 = vmatpush.msra.mxu0 0.0
        %971 = vmatpush.msra.mxu0 0.0
        %972 = vmatpush.msra.mxu0 0.0
        %973 = vmatpush.msra.mxu0 0.0
        %974 = vmatpush.msra.mxu0 0.0
        %975 = vmatpush.msra.mxu0 0.0
        %976 = vmatpush.msra.mxu0 %v955
        %977 = vmatmul.f32.gmra.mxu0 %v953
        %v978 = vpop.f32.mrf.mxu0
        %v979 = vadd.f32 0.0, %v978
        %980 = vdwg.mxu0
        %981 = vmatpush.msra.mxu0 0.0
        %982 = vmatpush.msra.mxu0 0.0
        %983 = vmatpush.msra.mxu0 0.0
        %984 = vmatpush.msra.mxu0 0.0
        %985 = vmatpush.msra.mxu0 0.0
        %986 = vmatpush.msra.mxu0 0.0
        %987 = vmatpush.msra.mxu0 0.0
        %988 = vmatpush.msra.mxu0 0.0
        %989 = vmatpush.msra.mxu0 0.0
        %990 = vmatpush.msra.mxu0 0.0
        %991 = vmatpush.msra.mxu0 0.0
        %992 = vmatpush.msra.mxu0 0.0
        %993 = vmatpush.msra.mxu0 0.0
        %994 = vmatpush.msra.mxu0 0.0
        %995 = vmatpush.msra.mxu0 0.0
        %996 = vmatpush.msra.mxu0 %v957
        %997 = vmatmul.f32.gmra.mxu0 %v953
        %v998 = vpop.f32.mrf.mxu0
        %v999 = vadd.f32 0.0, %v998
        %1000 = vdwg.mxu0
        %1001 = vmatpush.msra.mxu0 0.0
        %1002 = vmatpush.msra.mxu0 0.0
        %1003 = vmatpush.msra.mxu0 0.0
        %1004 = vmatpush.msra.mxu0 0.0
        %1005 = vmatpush.msra.mxu0 0.0
        %1006 = vmatpush.msra.mxu0 0.0
        %1007 = vmatpush.msra.mxu0 0.0
        %1008 = vmatpush.msra.mxu0 0.0
        %1009 = vmatpush.msra.mxu0 0.0
        %1010 = vmatpush.msra.mxu0 0.0
        %1011 = vmatpush.msra.mxu0 0.0
        %1012 = vmatpush.msra.mxu0 0.0
        %1013 = vmatpush.msra.mxu0 0.0
        %1014 = vmatpush.msra.mxu0 0.0
        %1015 = vmatpush.msra.mxu0 0.0
        %1016 = vmatpush.msra.mxu0 %v959
        %1017 = vmatmul.f32.gmra.mxu0 %v953
        %v1018 = vpop.f32.mrf.mxu0
        %v1019 = vadd.f32 0.0, %v1018
        %1020 = vdwg.mxu0
        %v1021 = vadd.f32 %v831, %v979
        %v1022 = vadd.f32 %v832, %v999
        %v1023 = vadd.f32 %v833, %v1019
        %v1024 = vld [vmem:[%s288] sm:$0xff]
        %v1025 = vld [vmem:[%s288 + $0x8] sm:$0xff]
        %s1026 = scalar_lea.vmem %s1, 32
        %v1027 = vld [vmem:[%s1026] sm:$0xff]
        %1030 = vst [vmem:[#allocation1] ss:$2 sm:$0xff] %v1024
        %s1031 = scalar_lea.vmem [#allocation1], 16
        %1032 = vst [vmem:[%s1031] ss:$2 sm:$0xff] %v1025
        %v1033 = vld.sshfl [vmem:[#allocation1] sm:$0xff pattern:$0x75316420]
        %v1034 = vld.sshfl [vmem:[#allocation1 + $0x8] sm:$0xff pattern:$0x75316420]
        %v1035 = vld.sshfl [vmem:[#allocation1 + $0x10] sm:$0xff pattern:$0x75316420]
        %v1036 = vld.sshfl [vmem:[#allocation1 + $0x18] sm:$0xff pattern:$0x75316420]
        %1037 = vrot.lane.b32.xlu0 %v1033, 78
        %v1038 = vpop.permute.xlu0 %1037
        %1039 = vrot.lane.b32.xlu0 %v1034, 78
        %v1040 = vpop.permute.xlu0 %1039
        %1041 = vrot.lane.b32.xlu0 %v1035, 78
        %v1042 = vpop.permute.xlu0 %1041
        %1043 = vrot.lane.b32.xlu0 %v1036, 78
        %v1044 = vpop.permute.xlu0 %1043
        %vm1045 = vcmask 637952
        %v1046 = vsel %vm1045, %v1038, %v1040
        %v1047 = vsel %vm1045, %v1040, %v1042
        %v1048 = vsel %vm1045, %v1042, %v1044
        %v1050 = vsel %vm318, %v1027, 0
        %v1052 = vsel %vm322, %v1046, 0
        %v1054 = vsel %vm322, %v1047, 0
        %v1056 = vsel %vm322, %v1048, 0
        %1058 = vmatpush.msra.mxu0 0.0
        %1059 = vmatpush.msra.mxu0 0.0
        %1060 = vmatpush.msra.mxu0 0.0
        %1061 = vmatpush.msra.mxu0 0.0
        %1062 = vmatpush.msra.mxu0 0.0
        %1063 = vmatpush.msra.mxu0 0.0
        %1064 = vmatpush.msra.mxu0 0.0
        %1065 = vmatpush.msra.mxu0 0.0
        %1066 = vmatpush.msra.mxu0 0.0
        %1067 = vmatpush.msra.mxu0 0.0
        %1068 = vmatpush.msra.mxu0 0.0
        %1069 = vmatpush.msra.mxu0 0.0
        %1070 = vmatpush.msra.mxu0 0.0
        %1071 = vmatpush.msra.mxu0 0.0
        %1072 = vmatpush.msra.mxu0 0.0
        %1073 = vmatpush.msra.mxu0 %v1052
        %1074 = vmatmul.f32.gmra.mxu0 %v1050
        %v1075 = vpop.f32.mrf.mxu0
        %v1076 = vadd.f32 0.0, %v1075
        %1077 = vdwg.mxu0
        %1078 = vmatpush.msra.mxu0 0.0
        %1079 = vmatpush.msra.mxu0 0.0
        %1080 = vmatpush.msra.mxu0 0.0
        %1081 = vmatpush.msra.mxu0 0.0
        %1082 = vmatpush.msra.mxu0 0.0
        %1083 = vmatpush.msra.mxu0 0.0
        %1084 = vmatpush.msra.mxu0 0.0
        %1085 = vmatpush.msra.mxu0 0.0
        %1086 = vmatpush.msra.mxu0 0.0
        %1087 = vmatpush.msra.mxu0 0.0
        %1088 = vmatpush.msra.mxu0 0.0
        %1089 = vmatpush.msra.mxu0 0.0
        %1090 = vmatpush.msra.mxu0 0.0
        %1091 = vmatpush.msra.mxu0 0.0
        %1092 = vmatpush.msra.mxu0 0.0
        %1093 = vmatpush.msra.mxu0 %v1054
        %1094 = vmatmul.f32.gmra.mxu0 %v1050
        %v1095 = vpop.f32.mrf.mxu0
        %v1096 = vadd.f32 0.0, %v1095
        %1097 = vdwg.mxu0
        %1098 = vmatpush.msra.mxu0 0.0
        %1099 = vmatpush.msra.mxu0 0.0
        %1100 = vmatpush.msra.mxu0 0.0
        %1101 = vmatpush.msra.mxu0 0.0
        %1102 = vmatpush.msra.mxu0 0.0
        %1103 = vmatpush.msra.mxu0 0.0
        %1104 = vmatpush.msra.mxu0 0.0
        %1105 = vmatpush.msra.mxu0 0.0
        %1106 = vmatpush.msra.mxu0 0.0
        %1107 = vmatpush.msra.mxu0 0.0
        %1108 = vmatpush.msra.mxu0 0.0
        %1109 = vmatpush.msra.mxu0 0.0
        %1110 = vmatpush.msra.mxu0 0.0
        %1111 = vmatpush.msra.mxu0 0.0
        %1112 = vmatpush.msra.mxu0 0.0
        %1113 = vmatpush.msra.mxu0 %v1056
        %1114 = vmatmul.f32.gmra.mxu0 %v1050
        %v1115 = vpop.f32.mrf.mxu0
        %v1116 = vadd.f32 0.0, %v1115
        %1117 = vdwg.mxu0
        %v1118 = vadd.f32 %v928, %v1076
        %v1119 = vadd.f32 %v929, %v1096
        %v1120 = vadd.f32 %v930, %v1116
        %s1121 = scalar_lea.vmem %s2, 4
        %v1122 = vld [vmem:[%s1121] sm:$0x1]
        %1123 = vst [vmem:[#allocation1] ss:$2 sm:$0xff] %v1024
        %s1124 = scalar_lea.vmem [#allocation1], 16
        %1125 = vst [vmem:[%s1124] ss:$2 sm:$0xff] %v1025
        %v1126 = vld.sshfl [vmem:[#allocation1] sm:$0xff pattern:$0x75316420]
        %v1127 = vld.sshfl [vmem:[#allocation1 + $0x8] sm:$0xff pattern:$0x75316420]
        %v1128 = vld.sshfl [vmem:[#allocation1 + $0x10] sm:$0xff pattern:$0x75316420]
        %v1129 = vld.sshfl [vmem:[#allocation1 + $0x18] sm:$0xff pattern:$0x75316420]
        %1130 = vrot.lane.b32.xlu0 %v1126, 78
        %v1131 = vpop.permute.xlu0 %1130
        %1132 = vrot.lane.b32.xlu0 %v1127, 78
        %v1133 = vpop.permute.xlu0 %1132
        %1134 = vrot.lane.b32.xlu0 %v1128, 78
        %v1135 = vpop.permute.xlu0 %1134
        %1136 = vrot.lane.b32.xlu0 %v1129, 78
        %v1137 = vpop.permute.xlu0 %1136
        %v1138 = vsel %vm1045, %v1131, %v1133
        %v1139 = vsel %vm1045, %v1133, %v1135
        %v1140 = vsel %vm1045, %v1135, %v1137
        %v1142 = vsel %vm318, %v1122, 0
        %v1144 = vsel %vm322, %v1138, 0
        %v1146 = vsel %vm322, %v1139, 0
        %v1148 = vsel %vm322, %v1140, 0
        %1150 = vmatpush.msra.mxu0 0.0
        %1151 = vmatpush.msra.mxu0 0.0
        %1152 = vmatpush.msra.mxu0 0.0
        %1153 = vmatpush.msra.mxu0 0.0
        %1154 = vmatpush.msra.mxu0 0.0
        %1155 = vmatpush.msra.mxu0 0.0
        %1156 = vmatpush.msra.mxu0 0.0
        %1157 = vmatpush.msra.mxu0 0.0
        %1158 = vmatpush.msra.mxu0 0.0
        %1159 = vmatpush.msra.mxu0 0.0
        %1160 = vmatpush.msra.mxu0 0.0
        %1161 = vmatpush.msra.mxu0 0.0
        %1162 = vmatpush.msra.mxu0 0.0
        %1163 = vmatpush.msra.mxu0 0.0
        %1164 = vmatpush.msra.mxu0 0.0
        %1165 = vmatpush.msra.mxu0 %v1144
        %1166 = vmatmul.f32.gmra.mxu0 %v1142
        %v1167 = vpop.f32.mrf.mxu0
        %v1168 = vadd.f32 0.0, %v1167
        %1169 = vdwg.mxu0
        %1170 = vmatpush.msra.mxu0 0.0
        %1171 = vmatpush.msra.mxu0 0.0
        %1172 = vmatpush.msra.mxu0 0.0
        %1173 = vmatpush.msra.mxu0 0.0
        %1174 = vmatpush.msra.mxu0 0.0
        %1175 = vmatpush.msra.mxu0 0.0
        %1176 = vmatpush.msra.mxu0 0.0
        %1177 = vmatpush.msra.mxu0 0.0
        %1178 = vmatpush.msra.mxu0 0.0
        %1179 = vmatpush.msra.mxu0 0.0
        %1180 = vmatpush.msra.mxu0 0.0
        %1181 = vmatpush.msra.mxu0 0.0
        %1182 = vmatpush.msra.mxu0 0.0
        %1183 = vmatpush.msra.mxu0 0.0
        %1184 = vmatpush.msra.mxu0 0.0
        %1185 = vmatpush.msra.mxu0 %v1146
        %1186 = vmatmul.f32.gmra.mxu0 %v1142
        %v1187 = vpop.f32.mrf.mxu0
        %v1188 = vadd.f32 0.0, %v1187
        %1189 = vdwg.mxu0
        %1190 = vmatpush.msra.mxu0 0.0
        %1191 = vmatpush.msra.mxu0 0.0
        %1192 = vmatpush.msra.mxu0 0.0
        %1193 = vmatpush.msra.mxu0 0.0
        %1194 = vmatpush.msra.mxu0 0.0
        %1195 = vmatpush.msra.mxu0 0.0
        %1196 = vmatpush.msra.mxu0 0.0
        %1197 = vmatpush.msra.mxu0 0.0
        %1198 = vmatpush.msra.mxu0 0.0
        %1199 = vmatpush.msra.mxu0 0.0
        %1200 = vmatpush.msra.mxu0 0.0
        %1201 = vmatpush.msra.mxu0 0.0
        %1202 = vmatpush.msra.mxu0 0.0
        %1203 = vmatpush.msra.mxu0 0.0
        %1204 = vmatpush.msra.mxu0 0.0
        %1205 = vmatpush.msra.mxu0 %v1148
        %1206 = vmatmul.f32.gmra.mxu0 %v1142
        %v1207 = vpop.f32.mrf.mxu0
        %v1208 = vadd.f32 0.0, %v1207
        %1209 = vdwg.mxu0
        %v1210 = vadd.f32 %v1021, %v1168
        %v1211 = vadd.f32 %v1022, %v1188
        %v1212 = vadd.f32 %v1023, %v1208
        %v1213 = vld [vmem:[%s288] sm:$0xff]
        %v1214 = vld [vmem:[%s288 + $0x8] sm:$0xff]
        %s1215 = scalar_lea.vmem %s1, 40
        %v1216 = vld [vmem:[%s1215] sm:$0xff]
        %1219 = vst [vmem:[#allocation1] ss:$2 sm:$0xff] %v1213
        %s1220 = scalar_lea.vmem [#allocation1], 16
        %1221 = vst [vmem:[%s1220] ss:$2 sm:$0xff] %v1214
        %v1222 = vld.sshfl [vmem:[#allocation1] sm:$0xff pattern:$0x75316420]
        %v1223 = vld.sshfl [vmem:[#allocation1 + $0x8] sm:$0xff pattern:$0x75316420]
        %v1224 = vld.sshfl [vmem:[#allocation1 + $0x10] sm:$0xff pattern:$0x75316420]
        %v1225 = vld.sshfl [vmem:[#allocation1 + $0x18] sm:$0xff pattern:$0x75316420]
        %1226 = vrot.lane.b32.xlu0 %v1222, 76
        %v1227 = vpop.permute.xlu0 %1226
        %1228 = vrot.lane.b32.xlu0 %v1223, 76
        %v1229 = vpop.permute.xlu0 %1228
        %1230 = vrot.lane.b32.xlu0 %v1224, 76
        %v1231 = vpop.permute.xlu0 %1230
        %1232 = vrot.lane.b32.xlu0 %v1225, 76
        %v1233 = vpop.permute.xlu0 %1232
        %vm1234 = vcmask 621568
        %v1235 = vsel %vm1234, %v1227, %v1229
        %v1236 = vsel %vm1234, %v1229, %v1231
        %v1237 = vsel %vm1234, %v1231, %v1233
        %v1239 = vsel %vm318, %v1216, 0
        %v1241 = vsel %vm322, %v1235, 0
        %v1243 = vsel %vm322, %v1236, 0
        %v1245 = vsel %vm322, %v1237, 0
        %1247 = vmatpush.msra.mxu0 0.0
        %1248 = vmatpush.msra.mxu0 0.0
        %1249 = vmatpush.msra.mxu0 0.0
        %1250 = vmatpush.msra.mxu0 0.0
        %1251 = vmatpush.msra.mxu0 0.0
        %1252 = vmatpush.msra.mxu0 0.0
        %1253 = vmatpush.msra.mxu0 0.0
        %1254 = vmatpush.msra.mxu0 0.0
        %1255 = vmatpush.msra.mxu0 0.0
        %1256 = vmatpush.msra.mxu0 0.0
        %1257 = vmatpush.msra.mxu0 0.0
        %1258 = vmatpush.msra.mxu0 0.0
        %1259 = vmatpush.msra.mxu0 0.0
        %1260 = vmatpush.msra.mxu0 0.0
        %1261 = vmatpush.msra.mxu0 0.0
        %1262 = vmatpush.msra.mxu0 %v1241
        %1263 = vmatmul.f32.gmra.mxu0 %v1239
        %v1264 = vpop.f32.mrf.mxu0
        %v1265 = vadd.f32 0.0, %v1264
        %1266 = vdwg.mxu0
        %1267 = vmatpush.msra.mxu0 0.0
        %1268 = vmatpush.msra.mxu0 0.0
        %1269 = vmatpush.msra.mxu0 0.0
        %1270 = vmatpush.msra.mxu0 0.0
        %1271 = vmatpush.msra.mxu0 0.0
        %1272 = vmatpush.msra.mxu0 0.0
        %1273 = vmatpush.msra.mxu0 0.0
        %1274 = vmatpush.msra.mxu0 0.0
        %1275 = vmatpush.msra.mxu0 0.0
        %1276 = vmatpush.msra.mxu0 0.0
        %1277 = vmatpush.msra.mxu0 0.0
        %1278 = vmatpush.msra.mxu0 0.0
        %1279 = vmatpush.msra.mxu0 0.0
        %1280 = vmatpush.msra.mxu0 0.0
        %1281 = vmatpush.msra.mxu0 0.0
        %1282 = vmatpush.msra.mxu0 %v1243
        %1283 = vmatmul.f32.gmra.mxu0 %v1239
        %v1284 = vpop.f32.mrf.mxu0
        %v1285 = vadd.f32 0.0, %v1284
        %1286 = vdwg.mxu0
        %1287 = vmatpush.msra.mxu0 0.0
        %1288 = vmatpush.msra.mxu0 0.0
        %1289 = vmatpush.msra.mxu0 0.0
        %1290 = vmatpush.msra.mxu0 0.0
        %1291 = vmatpush.msra.mxu0 0.0
        %1292 = vmatpush.msra.mxu0 0.0
        %1293 = vmatpush.msra.mxu0 0.0
        %1294 = vmatpush.msra.mxu0 0.0
        %1295 = vmatpush.msra.mxu0 0.0
        %1296 = vmatpush.msra.mxu0 0.0
        %1297 = vmatpush.msra.mxu0 0.0
        %1298 = vmatpush.msra.mxu0 0.0
        %1299 = vmatpush.msra.mxu0 0.0
        %1300 = vmatpush.msra.mxu0 0.0
        %1301 = vmatpush.msra.mxu0 0.0
        %1302 = vmatpush.msra.mxu0 %v1245
        %1303 = vmatmul.f32.gmra.mxu0 %v1239
        %v1304 = vpop.f32.mrf.mxu0
        %v1305 = vadd.f32 0.0, %v1304
        %1306 = vdwg.mxu0
        %v1307 = vadd.f32 %v1118, %v1265
        %v1308 = vadd.f32 %v1119, %v1285
        %v1309 = vadd.f32 %v1120, %v1305
        %s1310 = scalar_lea.vmem %s2, 5
        %v1311 = vld [vmem:[%s1310] sm:$0x1]
        %1312 = vst [vmem:[#allocation1] ss:$2 sm:$0xff] %v1213
        %s1313 = scalar_lea.vmem [#allocation1], 16
        %1314 = vst [vmem:[%s1313] ss:$2 sm:$0xff] %v1214
        %v1315 = vld.sshfl [vmem:[#allocation1] sm:$0xff pattern:$0x75316420]
        %v1316 = vld.sshfl [vmem:[#allocation1 + $0x8] sm:$0xff pattern:$0x75316420]
        %v1317 = vld.sshfl [vmem:[#allocation1 + $0x10] sm:$0xff pattern:$0x75316420]
        %v1318 = vld.sshfl [vmem:[#allocation1 + $0x18] sm:$0xff pattern:$0x75316420]
        %1319 = vrot.lane.b32.xlu0 %v1315, 77
        %v1320 = vpop.permute.xlu0 %1319
        %1321 = vrot.lane.b32.xlu0 %v1316, 77
        %v1322 = vpop.permute.xlu0 %1321
        %1323 = vrot.lane.b32.xlu0 %v1317, 77
        %v1324 = vpop.permute.xlu0 %1323
        %1325 = vrot.lane.b32.xlu0 %v1318, 77
        %v1326 = vpop.permute.xlu0 %1325
        %vm1327 = vcmask 629760
        %v1328 = vsel %vm1327, %v1320, %v1322
        %v1329 = vsel %vm1327, %v1322, %v1324
        %v1330 = vsel %vm1327, %v1324, %v1326
        %v1332 = vsel %vm318, %v1311, 0
        %v1334 = vsel %vm322, %v1328, 0
        %v1336 = vsel %vm322, %v1329, 0
        %v1338 = vsel %vm322, %v1330, 0
        %1340 = vmatpush.msra.mxu0 0.0
        %1341 = vmatpush.msra.mxu0 0.0
        %1342 = vmatpush.msra.mxu0 0.0
        %1343 = vmatpush.msra.mxu0 0.0
        %1344 = vmatpush.msra.mxu0 0.0
        %1345 = vmatpush.msra.mxu0 0.0
        %1346 = vmatpush.msra.mxu0 0.0
        %1347 = vmatpush.msra.mxu0 0.0
        %1348 = vmatpush.msra.mxu0 0.0
        %1349 = vmatpush.msra.mxu0 0.0
        %1350 = vmatpush.msra.mxu0 0.0
        %1351 = vmatpush.msra.mxu0 0.0
        %1352 = vmatpush.msra.mxu0 0.0
        %1353 = vmatpush.msra.mxu0 0.0
        %1354 = vmatpush.msra.mxu0 0.0
        %1355 = vmatpush.msra.mxu0 %v1334
        %1356 = vmatmul.f32.gmra.mxu0 %v1332
        %v1357 = vpop.f32.mrf.mxu0
        %v1358 = vadd.f32 0.0, %v1357
        %1359 = vdwg.mxu0
        %1360 = vmatpush.msra.mxu0 0.0
        %1361 = vmatpush.msra.mxu0 0.0
        %1362 = vmatpush.msra.mxu0 0.0
        %1363 = vmatpush.msra.mxu0 0.0
        %1364 = vmatpush.msra.mxu0 0.0
        %1365 = vmatpush.msra.mxu0 0.0
        %1366 = vmatpush.msra.mxu0 0.0
        %1367 = vmatpush.msra.mxu0 0.0
        %1368 = vmatpush.msra.mxu0 0.0
        %1369 = vmatpush.msra.mxu0 0.0
        %1370 = vmatpush.msra.mxu0 0.0
        %1371 = vmatpush.msra.mxu0 0.0
        %1372 = vmatpush.msra.mxu0 0.0
        %1373 = vmatpush.msra.mxu0 0.0
        %1374 = vmatpush.msra.mxu0 0.0
        %1375 = vmatpush.msra.mxu0 %v1336
        %1376 = vmatmul.f32.gmra.mxu0 %v1332
        %v1377 = vpop.f32.mrf.mxu0
        %v1378 = vadd.f32 0.0, %v1377
        %1379 = vdwg.mxu0
        %1380 = vmatpush.msra.mxu0 0.0
        %1381 = vmatpush.msra.mxu0 0.0
        %1382 = vmatpush.msra.mxu0 0.0
        %1383 = vmatpush.msra.mxu0 0.0
        %1384 = vmatpush.msra.mxu0 0.0
        %1385 = vmatpush.msra.mxu0 0.0
        %1386 = vmatpush.msra.mxu0 0.0
        %1387 = vmatpush.msra.mxu0 0.0
        %1388 = vmatpush.msra.mxu0 0.0
        %1389 = vmatpush.msra.mxu0 0.0
        %1390 = vmatpush.msra.mxu0 0.0
        %1391 = vmatpush.msra.mxu0 0.0
        %1392 = vmatpush.msra.mxu0 0.0
        %1393 = vmatpush.msra.mxu0 0.0
        %1394 = vmatpush.msra.mxu0 0.0
        %1395 = vmatpush.msra.mxu0 %v1338
        %1396 = vmatmul.f32.gmra.mxu0 %v1332
        %v1397 = vpop.f32.mrf.mxu0
        %v1398 = vadd.f32 0.0, %v1397
        %1399 = vdwg.mxu0
        %v1400 = vadd.f32 %v1210, %v1358
        %v1401 = vadd.f32 %v1211, %v1378
        %v1402 = vadd.f32 %v1212, %v1398
        %v1403 = vld [vmem:[%s288] sm:$0xff]
        %v1404 = vld [vmem:[%s288 + $0x8] sm:$0xff]
        %s1405 = scalar_lea.vmem %s1, 48
        %v1406 = vld [vmem:[%s1405] sm:$0xff]
        %1409 = vst [vmem:[#allocation1] ss:$2 sm:$0xff] %v1403
        %s1410 = scalar_lea.vmem [#allocation1], 16
        %1411 = vst [vmem:[%s1410] ss:$2 sm:$0xff] %v1404
        %v1412 = vld.sshfl [vmem:[#allocation1] sm:$0xff pattern:$0x75316420]
        %v1413 = vld.sshfl [vmem:[#allocation1 + $0x8] sm:$0xff pattern:$0x75316420]
        %v1414 = vld.sshfl [vmem:[#allocation1 + $0x10] sm:$0xff pattern:$0x75316420]
        %v1415 = vld.sshfl [vmem:[#allocation1 + $0x18] sm:$0xff pattern:$0x75316420]
        %1416 = vrot.lane.b32.xlu0 %v1412, 32
        %v1417 = vpop.permute.xlu0 %1416
        %1418 = vrot.lane.b32.xlu0 %v1413, 32
        %v1419 = vpop.permute.xlu0 %1418
        %1420 = vrot.lane.b32.xlu0 %v1414, 32
        %v1421 = vpop.permute.xlu0 %1420
        %1422 = vrot.lane.b32.xlu0 %v1415, 32
        %v1423 = vpop.permute.xlu0 %1422
        %vm1424 = vcmask 261120
        %v1425 = vsel %vm1424, %v1417, %v1419
        %v1426 = vsel %vm1424, %v1419, %v1421
        %v1427 = vsel %vm1424, %v1421, %v1423
        %v1429 = vsel %vm318, %v1406, 0
        %v1431 = vsel %vm322, %v1425, 0
        %v1433 = vsel %vm322, %v1426, 0
        %v1435 = vsel %vm322, %v1427, 0
        %1437 = vmatpush.msra.mxu0 0.0
        %1438 = vmatpush.msra.mxu0 0.0
        %1439 = vmatpush.msra.mxu0 0.0
        %1440 = vmatpush.msra.mxu0 0.0
        %1441 = vmatpush.msra.mxu0 0.0
        %1442 = vmatpush.msra.mxu0 0.0
        %1443 = vmatpush.msra.mxu0 0.0
        %1444 = vmatpush.msra.mxu0 0.0
        %1445 = vmatpush.msra.mxu0 0.0
        %1446 = vmatpush.msra.mxu0 0.0
        %1447 = vmatpush.msra.mxu0 0.0
        %1448 = vmatpush.msra.mxu0 0.0
        %1449 = vmatpush.msra.mxu0 0.0
        %1450 = vmatpush.msra.mxu0 0.0
        %1451 = vmatpush.msra.mxu0 0.0
        %1452 = vmatpush.msra.mxu0 %v1431
        %1453 = vmatmul.f32.gmra.mxu0 %v1429
        %v1454 = vpop.f32.mrf.mxu0
        %v1455 = vadd.f32 0.0, %v1454
        %1456 = vdwg.mxu0
        %1457 = vmatpush.msra.mxu0 0.0
        %1458 = vmatpush.msra.mxu0 0.0
        %1459 = vmatpush.msra.mxu0 0.0
        %1460 = vmatpush.msra.mxu0 0.0
        %1461 = vmatpush.msra.mxu0 0.0
        %1462 = vmatpush.msra.mxu0 0.0
        %1463 = vmatpush.msra.mxu0 0.0
        %1464 = vmatpush.msra.mxu0 0.0
        %1465 = vmatpush.msra.mxu0 0.0
        %1466 = vmatpush.msra.mxu0 0.0
        %1467 = vmatpush.msra.mxu0 0.0
        %1468 = vmatpush.msra.mxu0 0.0
        %1469 = vmatpush.msra.mxu0 0.0
        %1470 = vmatpush.msra.mxu0 0.0
        %1471 = vmatpush.msra.mxu0 0.0
        %1472 = vmatpush.msra.mxu0 %v1433
        %1473 = vmatmul.f32.gmra.mxu0 %v1429
        %v1474 = vpop.f32.mrf.mxu0
        %v1475 = vadd.f32 0.0, %v1474
        %1476 = vdwg.mxu0
        %1477 = vmatpush.msra.mxu0 0.0
        %1478 = vmatpush.msra.mxu0 0.0
        %1479 = vmatpush.msra.mxu0 0.0
        %1480 = vmatpush.msra.mxu0 0.0
        %1481 = vmatpush.msra.mxu0 0.0
        %1482 = vmatpush.msra.mxu0 0.0
        %1483 = vmatpush.msra.mxu0 0.0
        %1484 = vmatpush.msra.mxu0 0.0
        %1485 = vmatpush.msra.mxu0 0.0
        %1486 = vmatpush.msra.mxu0 0.0
        %1487 = vmatpush.msra.mxu0 0.0
        %1488 = vmatpush.msra.mxu0 0.0
        %1489 = vmatpush.msra.mxu0 0.0
        %1490 = vmatpush.msra.mxu0 0.0
        %1491 = vmatpush.msra.mxu0 0.0
        %1492 = vmatpush.msra.mxu0 %v1435
        %1493 = vmatmul.f32.gmra.mxu0 %v1429
        %v1494 = vpop.f32.mrf.mxu0
        %v1495 = vadd.f32 0.0, %v1494
        %1496 = vdwg.mxu0
        %v1497 = vadd.f32 %v1307, %v1455
        %v1498 = vadd.f32 %v1308, %v1475
        %v1499 = vadd.f32 %v1309, %v1495
        %s1500 = scalar_lea.vmem %s2, 6
        %v1501 = vld [vmem:[%s1500] sm:$0x1]
        %1502 = vst [vmem:[#allocation1] ss:$2 sm:$0xff] %v1403
        %s1503 = scalar_lea.vmem [#allocation1], 16
        %1504 = vst [vmem:[%s1503] ss:$2 sm:$0xff] %v1404
        %v1505 = vld.sshfl [vmem:[#allocation1] sm:$0xff pattern:$0x75316420]
        %v1506 = vld.sshfl [vmem:[#allocation1 + $0x8] sm:$0xff pattern:$0x75316420]
        %v1507 = vld.sshfl [vmem:[#allocation1 + $0x10] sm:$0xff pattern:$0x75316420]
        %v1508 = vld.sshfl [vmem:[#allocation1 + $0x18] sm:$0xff pattern:$0x75316420]
        %1509 = vrot.lane.b32.xlu0 %v1505, 55
        %v1510 = vpop.permute.xlu0 %1509
        %1511 = vrot.lane.b32.xlu0 %v1506, 55
        %v1512 = vpop.permute.xlu0 %1511
        %1513 = vrot.lane.b32.xlu0 %v1507, 55
        %v1514 = vpop.permute.xlu0 %1513
        %1515 = vrot.lane.b32.xlu0 %v1508, 55
        %v1516 = vpop.permute.xlu0 %1515
        %vm1517 = vcmask 449536
        %v1518 = vsel %vm1517, %v1510, %v1512
        %v1519 = vsel %vm1517, %v1512, %v1514
        %v1520 = vsel %vm1517, %v1514, %v1516
        %v1522 = vsel %vm318, %v1501, 0
        %v1524 = vsel %vm322, %v1518, 0
        %v1526 = vsel %vm322, %v1519, 0
        %v1528 = vsel %vm322, %v1520, 0
        %1530 = vmatpush.msra.mxu0 0.0
        %1531 = vmatpush.msra.mxu0 0.0
        %1532 = vmatpush.msra.mxu0 0.0
        %1533 = vmatpush.msra.mxu0 0.0
        %1534 = vmatpush.msra.mxu0 0.0
        %1535 = vmatpush.msra.mxu0 0.0
        %1536 = vmatpush.msra.mxu0 0.0
        %1537 = vmatpush.msra.mxu0 0.0
        %1538 = vmatpush.msra.mxu0 0.0
        %1539 = vmatpush.msra.mxu0 0.0
        %1540 = vmatpush.msra.mxu0 0.0
        %1541 = vmatpush.msra.mxu0 0.0
        %1542 = vmatpush.msra.mxu0 0.0
        %1543 = vmatpush.msra.mxu0 0.0
        %1544 = vmatpush.msra.mxu0 0.0
        %1545 = vmatpush.msra.mxu0 %v1524
        %1546 = vmatmul.f32.gmra.mxu0 %v1522
        %v1547 = vpop.f32.mrf.mxu0
        %v1548 = vadd.f32 0.0, %v1547
        %1549 = vdwg.mxu0
        %1550 = vmatpush.msra.mxu0 0.0
        %1551 = vmatpush.msra.mxu0 0.0
        %1552 = vmatpush.msra.mxu0 0.0
        %1553 = vmatpush.msra.mxu0 0.0
        %1554 = vmatpush.msra.mxu0 0.0
        %1555 = vmatpush.msra.mxu0 0.0
        %1556 = vmatpush.msra.mxu0 0.0
        %1557 = vmatpush.msra.mxu0 0.0
        %1558 = vmatpush.msra.mxu0 0.0
        %1559 = vmatpush.msra.mxu0 0.0
        %1560 = vmatpush.msra.mxu0 0.0
        %1561 = vmatpush.msra.mxu0 0.0
        %1562 = vmatpush.msra.mxu0 0.0
        %1563 = vmatpush.msra.mxu0 0.0
        %1564 = vmatpush.msra.mxu0 0.0
        %1565 = vmatpush.msra.mxu0 %v1526
        %1566 = vmatmul.f32.gmra.mxu0 %v1522
        %v1567 = vpop.f32.mrf.mxu0
        %v1568 = vadd.f32 0.0, %v1567
        %1569 = vdwg.mxu0
        %1570 = vmatpush.msra.mxu0 0.0
        %1571 = vmatpush.msra.mxu0 0.0
        %1572 = vmatpush.msra.mxu0 0.0
        %1573 = vmatpush.msra.mxu0 0.0
        %1574 = vmatpush.msra.mxu0 0.0
        %1575 = vmatpush.msra.mxu0 0.0
        %1576 = vmatpush.msra.mxu0 0.0
        %1577 = vmatpush.msra.mxu0 0.0
        %1578 = vmatpush.msra.mxu0 0.0
        %1579 = vmatpush.msra.mxu0 0.0
        %1580 = vmatpush.msra.mxu0 0.0
        %1581 = vmatpush.msra.mxu0 0.0
        %1582 = vmatpush.msra.mxu0 0.0
        %1583 = vmatpush.msra.mxu0 0.0
        %1584 = vmatpush.msra.mxu0 0.0
        %1585 = vmatpush.msra.mxu0 %v1528
        %1586 = vmatmul.f32.gmra.mxu0 %v1522
        %v1587 = vpop.f32.mrf.mxu0
        %v1588 = vadd.f32 0.0, %v1587
        %1589 = vdwg.mxu0
        %v1590 = vadd.f32 %v1400, %v1548
        %v1591 = vadd.f32 %v1401, %v1568
        %v1592 = vadd.f32 %v1402, %v1588
        %v1593 = vld [vmem:[%s288] sm:$0xff]
        %v1594 = vld [vmem:[%s288 + $0x8] sm:$0xff]
        %s1595 = scalar_lea.vmem %s1, 56
        %v1596 = vld [vmem:[%s1595] sm:$0xff]
        %1599 = vst [vmem:[#allocation1] ss:$2 sm:$0xff] %v1593
        %s1600 = scalar_lea.vmem [#allocation1], 16
        %1601 = vst [vmem:[%s1600] ss:$2 sm:$0xff] %v1594
        %v1602 = vld.sshfl [vmem:[#allocation1] sm:$0xff pattern:$0x75316420]
        %v1603 = vld.sshfl [vmem:[#allocation1 + $0x8] sm:$0xff pattern:$0x75316420]
        %v1604 = vld.sshfl [vmem:[#allocation1 + $0x10] sm:$0xff pattern:$0x75316420]
        %v1605 = vld.sshfl [vmem:[#allocation1 + $0x18] sm:$0xff pattern:$0x75316420]
        %1606 = vrot.lane.b32.xlu0 %v1602, 30
        %v1607 = vpop.permute.xlu0 %1606
        %1608 = vrot.lane.b32.xlu0 %v1603, 30
        %v1609 = vpop.permute.xlu0 %1608
        %1610 = vrot.lane.b32.xlu0 %v1604, 30
        %v1611 = vpop.permute.xlu0 %1610
        %1612 = vrot.lane.b32.xlu0 %v1605, 30
        %v1613 = vpop.permute.xlu0 %1612
        %vm1614 = vcmask 244736
        %v1615 = vsel %vm1614, %v1607, %v1609
        %v1616 = vsel %vm1614, %v1609, %v1611
        %v1617 = vsel %vm1614, %v1611, %v1613
        %v1619 = vsel %vm318, %v1596, 0
        %v1621 = vsel %vm322, %v1615, 0
        %v1623 = vsel %vm322, %v1616, 0
        %v1625 = vsel %vm322, %v1617, 0
        %1627 = vmatpush.msra.mxu0 0.0
        %1628 = vmatpush.msra.mxu0 0.0
        %1629 = vmatpush.msra.mxu0 0.0
        %1630 = vmatpush.msra.mxu0 0.0
        %1631 = vmatpush.msra.mxu0 0.0
        %1632 = vmatpush.msra.mxu0 0.0
        %1633 = vmatpush.msra.mxu0 0.0
        %1634 = vmatpush.msra.mxu0 0.0
        %1635 = vmatpush.msra.mxu0 0.0
        %1636 = vmatpush.msra.mxu0 0.0
        %1637 = vmatpush.msra.mxu0 0.0
        %1638 = vmatpush.msra.mxu0 0.0
        %1639 = vmatpush.msra.mxu0 0.0
        %1640 = vmatpush.msra.mxu0 0.0
        %1641 = vmatpush.msra.mxu0 0.0
        %1642 = vmatpush.msra.mxu0 %v1621
        %1643 = vmatmul.f32.gmra.mxu0 %v1619
        %v1644 = vpop.f32.mrf.mxu0
        %v1645 = vadd.f32 0.0, %v1644
        %1646 = vdwg.mxu0
        %1647 = vmatpush.msra.mxu0 0.0
        %1648 = vmatpush.msra.mxu0 0.0
        %1649 = vmatpush.msra.mxu0 0.0
        %1650 = vmatpush.msra.mxu0 0.0
        %1651 = vmatpush.msra.mxu0 0.0
        %1652 = vmatpush.msra.mxu0 0.0
        %1653 = vmatpush.msra.mxu0 0.0
        %1654 = vmatpush.msra.mxu0 0.0
        %1655 = vmatpush.msra.mxu0 0.0
        %1656 = vmatpush.msra.mxu0 0.0
        %1657 = vmatpush.msra.mxu0 0.0
        %1658 = vmatpush.msra.mxu0 0.0
        %1659 = vmatpush.msra.mxu0 0.0
        %1660 = vmatpush.msra.mxu0 0.0
        %1661 = vmatpush.msra.mxu0 0.0
        %1662 = vmatpush.msra.mxu0 %v1623
        %1663 = vmatmul.f32.gmra.mxu0 %v1619
        %v1664 = vpop.f32.mrf.mxu0
        %v1665 = vadd.f32 0.0, %v1664
        %1666 = vdwg.mxu0
        %1667 = vmatpush.msra.mxu0 0.0
        %1668 = vmatpush.msra.mxu0 0.0
        %1669 = vmatpush.msra.mxu0 0.0
        %1670 = vmatpush.msra.mxu0 0.0
        %1671 = vmatpush.msra.mxu0 0.0
        %1672 = vmatpush.msra.mxu0 0.0
        %1673 = vmatpush.msra.mxu0 0.0
        %1674 = vmatpush.msra.mxu0 0.0
        %1675 = vmatpush.msra.mxu0 0.0
        %1676 = vmatpush.msra.mxu0 0.0
        %1677 = vmatpush.msra.mxu0 0.0
        %1678 = vmatpush.msra.mxu0 0.0
        %1679 = vmatpush.msra.mxu0 0.0
        %1680 = vmatpush.msra.mxu0 0.0
        %1681 = vmatpush.msra.mxu0 0.0
        %1682 = vmatpush.msra.mxu0 %v1625
        %1683 = vmatmul.f32.gmra.mxu0 %v1619
        %v1684 = vpop.f32.mrf.mxu0
        %v1685 = vadd.f32 0.0, %v1684
        %1686 = vdwg.mxu0
        %v1687 = vadd.f32 %v1497, %v1645
        %v1688 = vadd.f32 %v1498, %v1665
        %v1689 = vadd.f32 %v1499, %v1685
        %s1690 = scalar_lea.vmem %s2, 7
        %v1691 = vld [vmem:[%s1690] sm:$0x1]
        %1692 = vst [vmem:[#allocation1] ss:$2 sm:$0xff] %v1593
        %s1693 = scalar_lea.vmem [#allocation1], 16
        %1694 = vst [vmem:[%s1693] ss:$2 sm:$0xff] %v1594
        %v1695 = vld.sshfl [vmem:[#allocation1] sm:$0xff pattern:$0x75316420]
        %v1696 = vld.sshfl [vmem:[#allocation1 + $0x8] sm:$0xff pattern:$0x75316420]
        %v1697 = vld.sshfl [vmem:[#allocation1 + $0x10] sm:$0xff pattern:$0x75316420]
        %v1698 = vld.sshfl [vmem:[#allocation1 + $0x18] sm:$0xff pattern:$0x75316420]
        %1699 = vrot.lane.b32.xlu0 %v1695, 54
        %v1700 = vpop.permute.xlu0 %1699
        %1701 = vrot.lane.b32.xlu0 %v1696, 54
        %v1702 = vpop.permute.xlu0 %1701
        %1703 = vrot.lane.b32.xlu0 %v1697, 54
        %v1704 = vpop.permute.xlu0 %1703
        %1705 = vrot.lane.b32.xlu0 %v1698, 54
        %v1706 = vpop.permute.xlu0 %1705
        %vm1707 = vcmask 441344
        %v1708 = vsel %vm1707, %v1700, %v1702
        %v1709 = vsel %vm1707, %v1702, %v1704
        %v1710 = vsel %vm1707, %v1704, %v1706
        %v1712 = vsel %vm318, %v1691, 0
        %v1714 = vsel %vm322, %v1708, 0
        %v1716 = vsel %vm322, %v1709, 0
        %v1718 = vsel %vm322, %v1710, 0
        %1720 = vmatpush.msra.mxu0 0.0
        %1721 = vmatpush.msra.mxu0 0.0
        %1722 = vmatpush.msra.mxu0 0.0
        %1723 = vmatpush.msra.mxu0 0.0
        %1724 = vmatpush.msra.mxu0 0.0
        %1725 = vmatpush.msra.mxu0 0.0
        %1726 = vmatpush.msra.mxu0 0.0
        %1727 = vmatpush.msra.mxu0 0.0
        %1728 = vmatpush.msra.mxu0 0.0
        %1729 = vmatpush.msra.mxu0 0.0
        %1730 = vmatpush.msra.mxu0 0.0
        %1731 = vmatpush.msra.mxu0 0.0
        %1732 = vmatpush.msra.mxu0 0.0
        %1733 = vmatpush.msra.mxu0 0.0
        %1734 = vmatpush.msra.mxu0 0.0
        %1735 = vmatpush.msra.mxu0 %v1714
        %1736 = vmatmul.f32.gmra.mxu0 %v1712
        %v1737 = vpop.f32.mrf.mxu0
        %v1738 = vadd.f32 0.0, %v1737
        %1739 = vdwg.mxu0
        %1740 = vmatpush.msra.mxu0 0.0
        %1741 = vmatpush.msra.mxu0 0.0
        %1742 = vmatpush.msra.mxu0 0.0
        %1743 = vmatpush.msra.mxu0 0.0
        %1744 = vmatpush.msra.mxu0 0.0
        %1745 = vmatpush.msra.mxu0 0.0
        %1746 = vmatpush.msra.mxu0 0.0
        %1747 = vmatpush.msra.mxu0 0.0
        %1748 = vmatpush.msra.mxu0 0.0
        %1749 = vmatpush.msra.mxu0 0.0
        %1750 = vmatpush.msra.mxu0 0.0
        %1751 = vmatpush.msra.mxu0 0.0
        %1752 = vmatpush.msra.mxu0 0.0
        %1753 = vmatpush.msra.mxu0 0.0
        %1754 = vmatpush.msra.mxu0 0.0
        %1755 = vmatpush.msra.mxu0 %v1716
        %1756 = vmatmul.f32.gmra.mxu0 %v1712
        %v1757 = vpop.f32.mrf.mxu0
        %v1758 = vadd.f32 0.0, %v1757
        %1759 = vdwg.mxu0
        %1760 = vmatpush.msra.mxu0 0.0
        %1761 = vmatpush.msra.mxu0 0.0
        %1762 = vmatpush.msra.mxu0 0.0
        %1763 = vmatpush.msra.mxu0 0.0
        %1764 = vmatpush.msra.mxu0 0.0
        %1765 = vmatpush.msra.mxu0 0.0
        %1766 = vmatpush.msra.mxu0 0.0
        %1767 = vmatpush.msra.mxu0 0.0
        %1768 = vmatpush.msra.mxu0 0.0
        %1769 = vmatpush.msra.mxu0 0.0
        %1770 = vmatpush.msra.mxu0 0.0
        %1771 = vmatpush.msra.mxu0 0.0
        %1772 = vmatpush.msra.mxu0 0.0
        %1773 = vmatpush.msra.mxu0 0.0
        %1774 = vmatpush.msra.mxu0 0.0
        %1775 = vmatpush.msra.mxu0 %v1718
        %1776 = vmatmul.f32.gmra.mxu0 %v1712
        %v1777 = vpop.f32.mrf.mxu0
        %v1778 = vadd.f32 0.0, %v1777
        %1779 = vdwg.mxu0
        %v1780 = vadd.f32 %v1590, %v1738
        %v1781 = vadd.f32 %v1591, %v1758
        %v1782 = vadd.f32 %v1592, %v1778
        %v1783 = vld [vmem:[%s288] sm:$0xff]
        %v1784 = vld [vmem:[%s288 + $0x8] sm:$0xff]
        %s1785 = scalar_lea.vmem %s1, 64
        %v1786 = vld [vmem:[%s1785] sm:$0xff]
        %1789 = vst [vmem:[#allocation1] ss:$2 sm:$0xff] %v1783
        %s1790 = scalar_lea.vmem [#allocation1], 16
        %1791 = vst [vmem:[%s1790] ss:$2 sm:$0xff] %v1784
        %v1792 = vld.sshfl [vmem:[#allocation1] sm:$0xff pattern:$0x75316420]
        %v1793 = vld.sshfl [vmem:[#allocation1 + $0x8] sm:$0xff pattern:$0x75316420]
        %v1794 = vld.sshfl [vmem:[#allocation1 + $0x10] sm:$0xff pattern:$0x75316420]
        %v1795 = vld.sshfl [vmem:[#allocation1 + $0x18] sm:$0xff pattern:$0x75316420]
        %1796 = vrot.lane.b32.xlu0 %v1792, 28
        %v1797 = vpop.permute.xlu0 %1796
        %1798 = vrot.lane.b32.xlu0 %v1793, 28
        %v1799 = vpop.permute.xlu0 %1798
        %1800 = vrot.lane.b32.xlu0 %v1794, 28
        %v1801 = vpop.permute.xlu0 %1800
        %1802 = vrot.lane.b32.xlu0 %v1795, 28
        %v1803 = vpop.permute.xlu0 %1802
        %vm1804 = vcmask 228352
        %v1805 = vsel %vm1804, %v1797, %v1799
        %v1806 = vsel %vm1804, %v1799, %v1801
        %v1807 = vsel %vm1804, %v1801, %v1803
        %v1809 = vsel %vm318, %v1786, 0
        %v1811 = vsel %vm322, %v1805, 0
        %v1813 = vsel %vm322, %v1806, 0
        %v1815 = vsel %vm322, %v1807, 0
        %1817 = vmatpush.msra.mxu0 0.0
        %1818 = vmatpush.msra.mxu0 0.0
        %1819 = vmatpush.msra.mxu0 0.0
        %1820 = vmatpush.msra.mxu0 0.0
        %1821 = vmatpush.msra.mxu0 0.0
        %1822 = vmatpush.msra.mxu0 0.0
        %1823 = vmatpush.msra.mxu0 0.0
        %1824 = vmatpush.msra.mxu0 0.0
        %1825 = vmatpush.msra.mxu0 0.0
        %1826 = vmatpush.msra.mxu0 0.0
        %1827 = vmatpush.msra.mxu0 0.0
        %1828 = vmatpush.msra.mxu0 0.0
        %1829 = vmatpush.msra.mxu0 0.0
        %1830 = vmatpush.msra.mxu0 0.0
        %1831 = vmatpush.msra.mxu0 0.0
        %1832 = vmatpush.msra.mxu0 %v1811
        %1833 = vmatmul.f32.gmra.mxu0 %v1809
        %v1834 = vpop.f32.mrf.mxu0
        %v1835 = vadd.f32 0.0, %v1834
        %1836 = vdwg.mxu0
        %1837 = vmatpush.msra.mxu0 0.0
        %1838 = vmatpush.msra.mxu0 0.0
        %1839 = vmatpush.msra.mxu0 0.0
        %1840 = vmatpush.msra.mxu0 0.0
        %1841 = vmatpush.msra.mxu0 0.0
        %1842 = vmatpush.msra.mxu0 0.0
        %1843 = vmatpush.msra.mxu0 0.0
        %1844 = vmatpush.msra.mxu0 0.0
        %1845 = vmatpush.msra.mxu0 0.0
        %1846 = vmatpush.msra.mxu0 0.0
        %1847 = vmatpush.msra.mxu0 0.0
        %1848 = vmatpush.msra.mxu0 0.0
        %1849 = vmatpush.msra.mxu0 0.0
        %1850 = vmatpush.msra.mxu0 0.0
        %1851 = vmatpush.msra.mxu0 0.0
        %1852 = vmatpush.msra.mxu0 %v1813
        %1853 = vmatmul.f32.gmra.mxu0 %v1809
        %v1854 = vpop.f32.mrf.mxu0
        %v1855 = vadd.f32 0.0, %v1854
        %1856 = vdwg.mxu0
        %1857 = vmatpush.msra.mxu0 0.0
        %1858 = vmatpush.msra.mxu0 0.0
        %1859 = vmatpush.msra.mxu0 0.0
        %1860 = vmatpush.msra.mxu0 0.0
        %1861 = vmatpush.msra.mxu0 0.0
        %1862 = vmatpush.msra.mxu0 0.0
        %1863 = vmatpush.msra.mxu0 0.0
        %1864 = vmatpush.msra.mxu0 0.0
        %1865 = vmatpush.msra.mxu0 0.0
        %1866 = vmatpush.msra.mxu0 0.0
        %1867 = vmatpush.msra.mxu0 0.0
        %1868 = vmatpush.msra.mxu0 0.0
        %1869 = vmatpush.msra.mxu0 0.0
        %1870 = vmatpush.msra.mxu0 0.0
        %1871 = vmatpush.msra.mxu0 0.0
        %1872 = vmatpush.msra.mxu0 %v1815
        %1873 = vmatmul.f32.gmra.mxu0 %v1809
        %v1874 = vpop.f32.mrf.mxu0
        %v1875 = vadd.f32 0.0, %v1874
        %1876 = vdwg.mxu0
        %v1877 = vadd.f32 %v1687, %v1835
        %v1878 = vadd.f32 %v1688, %v1855
        %v1879 = vadd.f32 %v1689, %v1875
        %s1880 = scalar_lea.vmem %s2, 8
        %v1881 = vld [vmem:[%s1880] sm:$0x1]
        %1882 = vst [vmem:[#allocation1] ss:$2 sm:$0xff] %v1783
        %s1883 = scalar_lea.vmem [#allocation1], 16
        %1884 = vst [vmem:[%s1883] ss:$2 sm:$0xff] %v1784
        %v1885 = vld.sshfl [vmem:[#allocation1] sm:$0xff pattern:$0x75316420]
        %v1886 = vld.sshfl [vmem:[#allocation1 + $0x8] sm:$0xff pattern:$0x75316420]
        %v1887 = vld.sshfl [vmem:[#allocation1 + $0x10] sm:$0xff pattern:$0x75316420]
        %v1888 = vld.sshfl [vmem:[#allocation1 + $0x18] sm:$0xff pattern:$0x75316420]
        %1889 = vrot.lane.b32.xlu0 %v1885, 53
        %v1890 = vpop.permute.xlu0 %1889
        %1891 = vrot.lane.b32.xlu0 %v1886, 53
        %v1892 = vpop.permute.xlu0 %1891
        %1893 = vrot.lane.b32.xlu0 %v1887, 53
        %v1894 = vpop.permute.xlu0 %1893
        %1895 = vrot.lane.b32.xlu0 %v1888, 53
        %v1896 = vpop.permute.xlu0 %1895
        %vm1897 = vcmask 433152
        %v1898 = vsel %vm1897, %v1890, %v1892
        %v1899 = vsel %vm1897, %v1892, %v1894
        %v1900 = vsel %vm1897, %v1894, %v1896
        %v1902 = vsel %vm318, %v1881, 0
        %v1904 = vsel %vm322, %v1898, 0
        %v1906 = vsel %vm322, %v1899, 0
        %v1908 = vsel %vm322, %v1900, 0
        %1910 = vmatpush.msra.mxu0 0.0
        %1911 = vmatpush.msra.mxu0 0.0
        %1912 = vmatpush.msra.mxu0 0.0
        %1913 = vmatpush.msra.mxu0 0.0
        %1914 = vmatpush.msra.mxu0 0.0
        %1915 = vmatpush.msra.mxu0 0.0
        %1916 = vmatpush.msra.mxu0 0.0
        %1917 = vmatpush.msra.mxu0 0.0
        %1918 = vmatpush.msra.mxu0 0.0
        %1919 = vmatpush.msra.mxu0 0.0
        %1920 = vmatpush.msra.mxu0 0.0
        %1921 = vmatpush.msra.mxu0 0.0
        %1922 = vmatpush.msra.mxu0 0.0
        %1923 = vmatpush.msra.mxu0 0.0
        %1924 = vmatpush.msra.mxu0 0.0
        %1925 = vmatpush.msra.mxu0 %v1904
        %1926 = vmatmul.f32.gmra.mxu0 %v1902
        %v1927 = vpop.f32.mrf.mxu0
        %v1928 = vadd.f32 0.0, %v1927
        %1929 = vdwg.mxu0
        %1930 = vmatpush.msra.mxu0 0.0
        %1931 = vmatpush.msra.mxu0 0.0
        %1932 = vmatpush.msra.mxu0 0.0
        %1933 = vmatpush.msra.mxu0 0.0
        %1934 = vmatpush.msra.mxu0 0.0
        %1935 = vmatpush.msra.mxu0 0.0
        %1936 = vmatpush.msra.mxu0 0.0
        %1937 = vmatpush.msra.mxu0 0.0
        %1938 = vmatpush.msra.mxu0 0.0
        %1939 = vmatpush.msra.mxu0 0.0
        %1940 = vmatpush.msra.mxu0 0.0
        %1941 = vmatpush.msra.mxu0 0.0
        %1942 = vmatpush.msra.mxu0 0.0
        %1943 = vmatpush.msra.mxu0 0.0
        %1944 = vmatpush.msra.mxu0 0.0
        %1945 = vmatpush.msra.mxu0 %v1906
        %1946 = vmatmul.f32.gmra.mxu0 %v1902
        %v1947 = vpop.f32.mrf.mxu0
        %v1948 = vadd.f32 0.0, %v1947
        %1949 = vdwg.mxu0
        %1950 = vmatpush.msra.mxu0 0.0
        %1951 = vmatpush.msra.mxu0 0.0
        %1952 = vmatpush.msra.mxu0 0.0
        %1953 = vmatpush.msra.mxu0 0.0
        %1954 = vmatpush.msra.mxu0 0.0
        %1955 = vmatpush.msra.mxu0 0.0
        %1956 = vmatpush.msra.mxu0 0.0
        %1957 = vmatpush.msra.mxu0 0.0
        %1958 = vmatpush.msra.mxu0 0.0
        %1959 = vmatpush.msra.mxu0 0.0
        %1960 = vmatpush.msra.mxu0 0.0
        %1961 = vmatpush.msra.mxu0 0.0
        %1962 = vmatpush.msra.mxu0 0.0
        %1963 = vmatpush.msra.mxu0 0.0
        %1964 = vmatpush.msra.mxu0 0.0
        %1965 = vmatpush.msra.mxu0 %v1908
        %1966 = vmatmul.f32.gmra.mxu0 %v1902
        %v1967 = vpop.f32.mrf.mxu0
        %v1968 = vadd.f32 0.0, %v1967
        %1969 = vdwg.mxu0
        %v1970 = vadd.f32 %v1780, %v1928
        %v1971 = vadd.f32 %v1781, %v1948
        %v1972 = vadd.f32 %v1782, %v1968
        %s1973 = sld [smem:[#allocation2]]
        %v1974 = vstv %s1973
        %v1975 = vadd.f32 %v1970, %v1974
        %v1976 = vadd.f32 %v1971, %v1974
        %v1977 = vadd.f32 %v1972, %v1974
        %v1978 = vxor.u32 %v1975, 2147483648
        %v1979 = vxor.u32 %v1976, 2147483648
        %v1980 = vxor.u32 %v1977, 2147483648
        %v1981 = vmul.f32 %v1978, 1.442695
        %v1982 = vpow.pop %v1981
        %v1983 = vmul.f32 %v1979, 1.442695
        %v1984 = vpow.pop %v1983
        %v1985 = vmul.f32 %v1980, 1.442695
        %v1986 = vpow.pop %v1985
        %v1987 = vadd.f32 %v1982, 1.0
        %v1988 = vadd.f32 %v1984, 1.0
        %v1989 = vadd.f32 %v1986, 1.0
        %v1990 = vrcp.pop %v1987
        %v1991 = vmul.f32 %v1987, %v1990
        %v1992 = vsub.f32 1.0, %v1991
        %v1993 = vmul.f32 %v1990, %v1992
        %v1994 = vadd.f32 %v1990, %v1993
        %vm1995 = vweird.f32 %v1987
        %vm1996 = vweird.f32 %v1990
        %vm1997 = vmor %vm1995, %vm1996
        %v1998 = vsel %vm1997, %v1990, %v1994
        %v1999 = vand.u32 2147483647, %v1987
        %vm2000 = vcmp.eq.f32.partialorder %v1999, 8.507059e+37
        %v2001 = vand.u32 %v1987, 2147483648
        %v2002 = vor.u32 1.1754944e-38, %v2001
        %v2003 = vsel %vm2000, %v2002, %v1998
        %v2004 = vmul.f32 1.0, %v2003
        %v2005 = vrcp.pop %v1988
        %v2006 = vmul.f32 %v1988, %v2005
        %v2007 = vsub.f32 1.0, %v2006
        %v2008 = vmul.f32 %v2005, %v2007
        %v2009 = vadd.f32 %v2005, %v2008
        %vm2010 = vweird.f32 %v1988
        %vm2011 = vweird.f32 %v2005
        %vm2012 = vmor %vm2010, %vm2011
        %v2013 = vsel %vm2012, %v2005, %v2009
        %v2014 = vand.u32 2147483647, %v1988
        %vm2015 = vcmp.eq.f32.partialorder %v2014, 8.507059e+37
        %v2016 = vand.u32 %v1988, 2147483648
        %v2017 = vor.u32 1.1754944e-38, %v2016
        %v2018 = vsel %vm2015, %v2017, %v2013
        %v2019 = vmul.f32 1.0, %v2018
        %v2020 = vrcp.pop %v1989
        %v2021 = vmul.f32 %v1989, %v2020
        %v2022 = vsub.f32 1.0, %v2021
        %v2023 = vmul.f32 %v2020, %v2022
        %v2024 = vadd.f32 %v2020, %v2023
        %vm2025 = vweird.f32 %v1989
        %vm2026 = vweird.f32 %v2020
        %vm2027 = vmor %vm2025, %vm2026
        %v2028 = vsel %vm2027, %v2020, %v2024
        %v2029 = vand.u32 2147483647, %v1989
        %vm2030 = vcmp.eq.f32.partialorder %v2029, 8.507059e+37
        %v2031 = vand.u32 %v1989, 2147483648
        %v2032 = vor.u32 1.1754944e-38, %v2031
        %v2033 = vsel %vm2030, %v2032, %v2028
        %v2034 = vmul.f32 1.0, %v2033
        %v2035 = vld [vmem:[%s4] sm:$0xff]
        %2037 = vset.pattern.permute.xlu0 0
        %2038 = vperm.xlu0 %2037, %v2035
        %v2039 = vpop.permute.xlu0 %2038
        %v2041 = vmul.f32 %v1877, %v2039
        %v2042 = vmul.f32 %v1878, %v2039
        %v2043 = vmul.f32 %v1879, %v2039
        %v2044 = vld [vmem:[%s5] sm:$0xff]
        %2046 = vset.pattern.permute.xlu0 0
        %2047 = vperm.xlu0 %2046, %v2044
        %v2048 = vpop.permute.xlu0 %2047
        %v2050 = vadd.f32 %v2041, %v2048
        %v2051 = vadd.f32 %v2042, %v2048
        %v2052 = vadd.f32 %v2043, %v2048
        %v2053 = vmax.f32 %v2050, 0.0
        %v2054 = vmax.f32 %v2051, 0.0
        %v2055 = vmax.f32 %v2052, 0.0
        %v2056 = vperm.slane %v2004, 0
        %v2057 = vperm.slane %v2019, 0
        %v2058 = vperm.slane %v2034, 0
        %v2059 = vmul.f32 %v2053, %v2056
        %v2060 = vmul.f32 %v2054, %v2057
        %v2061 = vmul.f32 %v2055, %v2058
        %2062 = vst [vmem:[%s276] sm:$0xff] %v2059
        %2063 = vst [vmem:[%s276 + $0x8] sm:$0xff] %v2060
        %2064 = vst [vmem:[%s276 + $0x10] sm:$0xff] %v2061
        %v2068 = vrot.slane %v2019, 7
        %v2069 = vrot.slane %v2034, 6
        %vm2070 = vcmask 1040384
        %v2071 = vsel %vm2070, %v2004, %v2068
        %vm2072 = vcmask 1041408
        %v2073 = vsel %vm2072, %v2071, %v2069
        %v2075 = vlaneseq
        %vm2076 = vcmp.ge.s32.totalorder %v2075, 0
        %vm2077 = vcmp.lt.s32.totalorder %v2075, 384
        %vm2078 = vmand %vm2076, %vm2077
        %2079 = vst.msk [vmem:[%s283] sm:$0x7] %vm2078, %v2073
        %s2080 = sand.u32 %s165, 1
        %s2081 = scalar_lea.sflag [#allocation4], %s2080
        %s2082 = sand.u32 %s165, 1
        %s2083 = smul.addr %s2082, 24
        %s2084 = scalar_lea.vmem [#allocation3], %s2083
        %s2085 = sand.u32 %s191, 1
        %s2086 = scalar_lea.sflag [#allocation6], %s2085
        %s2087 = sand.u32 %s191, 1
        %s2088 = smul.addr %s2087, 3
        %s2089 = scalar_lea.vmem [#allocation5], %s2088
        // Predicated region
        $region45: #{tpu_custom_call.1} parent=43 // pred_check
          %p2090 = pneg %p175
        $region46: #{tpu_custom_call.1} parent=43 // pred_check_branch
          %2092 = sbr.rel (%p2090) target = $region48
        $region47: #{tpu_custom_call.1} parent=43 // pred_region
          %2094 = vsyncadd %s2081, 0
          %s2095 = smul.addr %s26, 3
          %s2096 = smul.addr %s2095, 8
          %s2097 = scalar_lea.hbm %s6, %s2096
          %s2099 = sshll.u32 %s2084, 4
          %s2100 = int_to_ptr.vmem [resolvable:$true] %s2099
          %s2101 = sshll.u32 %s2097, 4
          %s2102 = int_to_ptr.hbm [resolvable:$true] %s2101
          %2104 = dma.vmem_to_hbm [thread:$0]  %s2100, 384, %s2102, %s2081
        $region48: #{tpu_custom_call.1} parent=43 // pred_fallthru
          _
        // Predicated region
        $region49: #{tpu_custom_call.1} parent=43 // pred_check
          %p2105 = pneg %p201
        $region50: #{tpu_custom_call.1} parent=43 // pred_check_branch
          %2107 = sbr.rel (%p2105) target = $region52
        $region51: #{tpu_custom_call.1} parent=43 // pred_region
          %2109 = vsyncadd %s2086, 0
          %s2110 = smul.addr %s26, 3
          %s2111 = scalar_lea.hbm %s7, %s2110
          %s2113 = sshll.u32 %s2089, 4
          %s2114 = int_to_ptr.vmem [resolvable:$true] %s2113
          %s2115 = sshll.u32 %s2111, 4
          %s2116 = int_to_ptr.hbm [resolvable:$true] %s2115
          %2118 = dma.vmem_to_hbm [thread:$0]  %s2114, 48, %s2116, %s2086
        $region52: #{tpu_custom_call.1} parent=43 // pred_fallthru
          _
      $region44: #{tpu_custom_call.1} parent=5 // pred_fallthru
        _
      %p2119 = scmp.le.s32.totalorder 2, %s21
      // Predicated region
      $region53: #{tpu_custom_call.1} parent=5 // pred_check
        %p2120 = pneg %p2119
      $region54: #{tpu_custom_call.1} parent=5 // pred_check_branch
        %2122 = sbr.rel (%p2120) target = $region56
      $region55: #{tpu_custom_call.1} parent=5 // pred_region
        %s2123 = ssub.s32 %s21, 2
        // Predicated region
        $region57: #{tpu_custom_call.1} parent=55 // pred_check
          %p2124 = pneg %p181
        $region58: #{tpu_custom_call.1} parent=55 // pred_check_branch
          %2126 = sbr.rel (%p2124) target = $region60
        $region59: #{tpu_custom_call.1} parent=55 // pred_region
          %s2127 = sand.u32 %s166, 1
          %s2128 = scalar_lea.sflag [#allocation4], %s2127
          %s2129 = sand.u32 %s166, 1
          %s2130 = smul.addr %s2129, 24
          %s2131 = scalar_lea.vmem [#allocation3], %s2130
          %2133 = dma.done %s2128, 384
        $region60: #{tpu_custom_call.1} parent=55 // pred_fallthru
          _
        // Predicated region
        $region61: #{tpu_custom_call.1} parent=55 // pred_check
          %p2134 = pneg %p207
        $region62: #{tpu_custom_call.1} parent=55 // pred_check_branch
          %2136 = sbr.rel (%p2134) target = $region64
        $region63: #{tpu_custom_call.1} parent=55 // pred_region
          %s2137 = sand.u32 %s192, 1
          %s2138 = scalar_lea.sflag [#allocation6], %s2137
          %s2139 = sand.u32 %s192, 1
          %s2140 = smul.addr %s2139, 3
          %s2141 = scalar_lea.vmem [#allocation5], %s2140
          %2143 = dma.done %s2138, 48
        $region64: #{tpu_custom_call.1} parent=55 // pred_fallthru
          _
      $region56: #{tpu_custom_call.1} parent=5 // pred_fallthru
        _
    $region6: #{tpu_custom_call.1} parent=1 // loop_footer
      %s25 = sadd.s32 1, %s21
    $region7: #{tpu_custom_call.1} parent=1 // loop_footer_branch
      %20 = sbr.rel target = $region3
    $region8: #{tpu_custom_call.1} parent=1 // loop_exit
      _
    %2144 = vsyncpa [#allocation4], 1
    %s2145 = scalar_lea.sflag [#allocation4], 1
    %2146 = vsyncpa %s2145, 1
    %2147 = vsyncpa [#allocation6], 1
    %s2148 = scalar_lea.sflag [#allocation6], 1
    %2149 = vsyncpa %s2148, 1

</llo_original>
